<compile_context>
chip_gen: v5e
topology: v5e:2x2
jax: 0.10.0
libtpu: 0.0.40
codegen_flags: <defaults>
</compile_context>

<pallas_src>
import jax
import jax.numpy as jnp
from jax.experimental import pallas as pl
from jax.experimental.pallas import tpu as pltpu

# Logical dims (PyTorch module) and their 128-aligned padded counterparts.
IN_DIM, H1, H2, OUT = 784, 300, 200, 10
IN_P, H1_P, H2_P, OUT_P = 896, 384, 256, 128


def _round_up(n, m):
    return ((n + m - 1) // m) * m


def _dnn_kernel(x_ref, w1_ref, b1_ref, w2_ref, b2_ref, w3_ref, b3_ref, o_ref):
    x = x_ref[...]                                                    # (TB, 896) bf16

    # fc1 + sigmoid (bf16 matmul, f32 accumulate; sigmoid via tanh on EUP)
    h1 = jnp.dot(x, w1_ref[...], preferred_element_type=jnp.float32) + b1_ref[...]
    h1 = 0.5 * jnp.tanh(0.5 * h1) + 0.5                               # (TB, 384) f32

    # fc2 + sigmoid
    h2 = jnp.dot(h1.astype(jnp.bfloat16), w2_ref[...],
                 preferred_element_type=jnp.float32) + b2_ref[...]
    h2 = 0.5 * jnp.tanh(0.5 * h2) + 0.5                               # (TB, 256) f32

    # fc3
    logits = jnp.dot(h2.astype(jnp.bfloat16), w3_ref[...],
                     preferred_element_type=jnp.float32) + b3_ref[...]  # (TB, 128) f32

    # Mask padded logit lanes (columns >= OUT) so they don't corrupt the softmax.
    lane = jax.lax.broadcasted_iota(jnp.int32, logits.shape, 1)
    logits = jnp.where(lane < OUT, logits, -1e30)

    # Numerically stable softmax over dim=1.
    m = jnp.max(logits, axis=1, keepdims=True)
    e = jnp.exp(logits - m)
    denom = jnp.sum(e, axis=1, keepdims=True)
    o_ref[...] = (e * pl.reciprocal(denom, approx=True)).astype(o_ref.dtype)


def prepare_params(params):
    """One-time weight prep: transpose to (in,out), zero-pad to 128-aligned, cast bf16.

    Zero padding is numerically a no-op: padded w1 rows / w2,w3 rows are zero so the
    padded activation columns (which become sigmoid(0)=0.5) contribute nothing.
    """
    def pad_w(w_t, rows, cols):
        out = jnp.zeros((rows, cols), jnp.float32)
        out = out.at[: w_t.shape[0], : w_t.shape[1]].set(w_t)
        return out.astype(jnp.bfloat16)

    def pad_b(b, cols):
        out = jnp.zeros((1, cols), jnp.float32)
        return out.at[0, : b.shape[0]].set(b)

    w1 = pad_w(params["w1"].T, IN_P, H1_P)     # (896, 384) bf16
    w2 = pad_w(params["w2"].T, H1_P, H2_P)     # (384, 256) bf16
    w3 = pad_w(params["w3"].T, H2_P, OUT_P)    # (256, 128) bf16
    b1 = pad_b(params["b1"], H1_P)             # (1, 384) f32
    b2 = pad_b(params["b2"], H2_P)             # (1, 256) f32
    b3 = pad_b(params["b3"], OUT_P)            # (1, 128) f32
    return (w1, b1, w2, b2, w3, b3)


def dnn_forward(x, prepared, *, batch_tile=256):
    """x: (B, 784) float32. prepared: output of prepare_params()."""
    B = x.shape[0]
    TB = min(batch_tile, _round_up(B, 8))       # batch tile, multiple of 8
    Bp = _round_up(B, TB)
    grid = (Bp // TB,)

    # Pad x to (Bp, 896) and cast to bf16 (halves activation DMA; padded cols are 0).
    xp = jnp.zeros((Bp, IN_P), jnp.bfloat16)
    xp = xp.at[:B, :IN_DIM].set(x.astype(jnp.bfloat16))

    w1, b1, w2, b2, w3, b3 = prepared

    out = pl.pallas_call(
        _dnn_kernel,
        out_shape=jax.ShapeDtypeStruct((Bp, OUT_P), jnp.float32),
        grid_spec=pltpu.PrefetchScalarGridSpec(
            num_scalar_prefetch=0,
            grid=grid,
            in_specs=[
                pl.BlockSpec((TB, IN_P), lambda i: (i, 0)),     # x tile (pipelined)
                pl.BlockSpec((IN_P, H1_P), lambda i: (0, 0)),   # weights stay resident
                pl.BlockSpec((1, H1_P), lambda i: (0, 0)),
                pl.BlockSpec((H1_P, H2_P), lambda i: (0, 0)),
                pl.BlockSpec((1, H2_P), lambda i: (0, 0)),
                pl.BlockSpec((H2_P, OUT_P), lambda i: (0, 0)),
                pl.BlockSpec((1, OUT_P), lambda i: (0, 0)),
            ],
            out_specs=pl.BlockSpec((TB, OUT_P), lambda i: (i, 0)),
        ),
        compiler_params=pltpu.CompilerParams(
            dimension_semantics=("parallel",)),
    )(xp, w1, b1, w2, b2, w3, b3)

    return out[:B, :OUT]


def init_params(key):
    """Deterministic init with PyTorch nn.Linear shapes: W (out, in), b (out,)."""
    dims = [(300, 784), (200, 300), (10, 200)]
    params = {}
    for i, (out_d, in_d) in enumerate(dims, start=1):
        key, kw, kb = jax.random.split(key, 3)
        bound = 1.0 / jnp.sqrt(in_d)
        params[f"w{i}"] = jax.random.uniform(
            kw, (out_d, in_d), jnp.float32, minval=-bound, maxval=bound)
        params[f"b{i}"] = jax.random.uniform(
            kb, (out_d,), jnp.float32, minval=-bound, maxval=bound)
    return params


def reference_forward(x, params):
    """Full-f32 reference (matches the PyTorch module exactly)."""
    h1 = jax.nn.sigmoid(x @ params["w1"].T + params["b1"])
    h2 = jax.nn.sigmoid(h1 @ params["w2"].T + params["b2"])
    logits = h2 @ params["w3"].T + params["b3"]
    return jax.nn.softmax(logits, axis=1)


def reference_forward_bf16(x, params):
    """Reference mimicking the kernel's bf16 inputs / f32 accumulation."""
    bf = lambda a: a.astype(jnp.bfloat16).astype(jnp.float32)
    h1 = jax.nn.sigmoid(
        jnp.dot(bf(x), bf(params["w1"].T), preferred_element_type=jnp.float32)
        + params["b1"])
    h2 = jax.nn.sigmoid(
        jnp.dot(bf(h1), bf(params["w2"].T), preferred_element_type=jnp.float32)
        + params["b2"])
    logits = (jnp.dot(bf(h2), bf(params["w3"].T), preferred_element_type=jnp.float32)
              + params["b3"])
    return jax.nn.softmax(logits, axis=1)


if __name__ == "__main__":
    key = jax.random.PRNGKey(0)
    key, kx = jax.random.split(key)
    batch = 8
    x = jax.random.normal(kx, (batch, IN_DIM), jnp.float32)
    params = init_params(key)
    prepared = prepare_params(params)

    out = dnn_forward(x, prepared)
    out = jax.block_until_ready(out)

    assert out.shape == (batch, OUT)
    # approx reciprocal in the softmax => rows sum to 1 within EUP-vrcp accuracy
    assert jnp.allclose(jnp.sum(out, axis=1), 1.0, atol=5e-3)
    # tight check vs. a reference with matching bf16 operand precision
    ref_bf16 = reference_forward_bf16(x, params)
    assert jnp.allclose(out, ref_bf16, atol=2e-3), float(jnp.max(jnp.abs(out - ref_bf16)))
    # loose check vs. the exact f32 PyTorch-equivalent reference
    ref_f32 = reference_forward(x, params)
    assert jnp.allclose(out, ref_f32, atol=3e-2), float(jnp.max(jnp.abs(out - ref_f32)))

    print("KERNEL_OK")
</pallas_src>

<mosaic_0001>
module attributes {stable_mosaic.version = 11 : i64} {
  func.func @_dnn_kernel(%arg0: i32, %arg1: memref<8x896xbf16, #tpu.memory_space<vmem>>, %arg2: memref<896x384xbf16, #tpu.memory_space<vmem>>, %arg3: memref<1x384xf32, #tpu.memory_space<vmem>>, %arg4: memref<384x256xbf16, #tpu.memory_space<vmem>>, %arg5: memref<1x256xf32, #tpu.memory_space<vmem>>, %arg6: memref<256x128xbf16, #tpu.memory_space<vmem>>, %arg7: memref<1x128xf32, #tpu.memory_space<vmem>>, %arg8: memref<8x128xf32, #tpu.memory_space<vmem>>) attributes {dimension_semantics = [#tpu.dimension_semantics<parallel>], iteration_bounds = array<i64: 1>, scalar_prefetch = 0 : i64, scratch_operands = 0 : i64, tpu.core_type = #tpu.core_type<tc>, window_params = [{transform_indices = @transform_0, window_bounds = array<i64: 8, 896>}, {pipeline_mode = #tpu.pipeline_mode<synchronous>, transform_indices = @transform_1, window_bounds = array<i64: 896, 384>}, {pipeline_mode = #tpu.pipeline_mode<synchronous>, transform_indices = @transform_2, window_bounds = array<i64: 1, 384>}, {pipeline_mode = #tpu.pipeline_mode<synchronous>, transform_indices = @transform_3, window_bounds = array<i64: 384, 256>}, {pipeline_mode = #tpu.pipeline_mode<synchronous>, transform_indices = @transform_4, window_bounds = array<i64: 1, 256>}, {pipeline_mode = #tpu.pipeline_mode<synchronous>, transform_indices = @transform_5, window_bounds = array<i64: 256, 128>}, {pipeline_mode = #tpu.pipeline_mode<synchronous>, transform_indices = @transform_6, window_bounds = array<i64: 1, 128>}, {transform_indices = @transform_7, window_bounds = array<i64: 8, 128>}]} {
    %c0 = arith.constant 0 : index
    %c0_0 = arith.constant 0 : index
    %0 = vector.load %arg1[%c0, %c0_0] : memref<8x896xbf16, #tpu.memory_space<vmem>>, vector<8x896xbf16>
    %c0_1 = arith.constant 0 : index
    %c0_2 = arith.constant 0 : index
    %1 = vector.load %arg2[%c0_1, %c0_2] : memref<896x384xbf16, #tpu.memory_space<vmem>>, vector<896x384xbf16>
    %cst = arith.constant dense<0.000000e+00> : vector<8x384xf32>
    %2 = tpu.matmul %0, %1, %cst {dimension_numbers = #tpu.dot_dimension_numbers<[1], [0], [0], [1], [0, 0, 1, 1], [], []>} : vector<8x896xbf16>, vector<896x384xbf16>, vector<8x384xf32> -> vector<8x384xf32>
    %c0_3 = arith.constant 0 : index
    %c0_4 = arith.constant 0 : index
    %3 = vector.load %arg3[%c0_3, %c0_4] : memref<1x384xf32, #tpu.memory_space<vmem>>, vector<1x384xf32>
    %4 = vector.broadcast %3 : vector<1x384xf32> to vector<8x384xf32>
    %5 = arith.addf %2, %4 : vector<8x384xf32>
    %cst_5 = arith.constant 5.000000e-01 : f32
    %6 = vector.broadcast %cst_5 : f32 to vector<8x384xf32>
    %7 = arith.mulf %6, %5 : vector<8x384xf32>
    %8 = math.tanh %7 : vector<8x384xf32>
    %cst_6 = arith.constant 5.000000e-01 : f32
    %9 = vector.broadcast %cst_6 : f32 to vector<8x384xf32>
    %10 = arith.mulf %9, %8 : vector<8x384xf32>
    %cst_7 = arith.constant 5.000000e-01 : f32
    %11 = vector.broadcast %cst_7 : f32 to vector<8x384xf32>
    %12 = arith.addf %10, %11 : vector<8x384xf32>
    %13 = arith.truncf %12 : vector<8x384xf32> to vector<8x384xbf16>
    %c0_8 = arith.constant 0 : index
    %c0_9 = arith.constant 0 : index
    %14 = vector.load %arg4[%c0_8, %c0_9] : memref<384x256xbf16, #tpu.memory_space<vmem>>, vector<384x256xbf16>
    %cst_10 = arith.constant dense<0.000000e+00> : vector<8x256xf32>
    %15 = tpu.matmul %13, %14, %cst_10 {dimension_numbers = #tpu.dot_dimension_numbers<[1], [0], [0], [1], [0, 0, 1, 1], [], []>} : vector<8x384xbf16>, vector<384x256xbf16>, vector<8x256xf32> -> vector<8x256xf32>
    %c0_11 = arith.constant 0 : index
    %c0_12 = arith.constant 0 : index
    %16 = vector.load %arg5[%c0_11, %c0_12] : memref<1x256xf32, #tpu.memory_space<vmem>>, vector<1x256xf32>
    %17 = vector.broadcast %16 : vector<1x256xf32> to vector<8x256xf32>
    %18 = arith.addf %15, %17 : vector<8x256xf32>
    %cst_13 = arith.constant 5.000000e-01 : f32
    %19 = vector.broadcast %cst_13 : f32 to vector<8x256xf32>
    %20 = arith.mulf %19, %18 : vector<8x256xf32>
    %21 = math.tanh %20 : vector<8x256xf32>
    %cst_14 = arith.constant 5.000000e-01 : f32
    %22 = vector.broadcast %cst_14 : f32 to vector<8x256xf32>
    %23 = arith.mulf %22, %21 : vector<8x256xf32>
    %cst_15 = arith.constant 5.000000e-01 : f32
    %24 = vector.broadcast %cst_15 : f32 to vector<8x256xf32>
    %25 = arith.addf %23, %24 : vector<8x256xf32>
    %26 = arith.truncf %25 : vector<8x256xf32> to vector<8x256xbf16>
    %c0_16 = arith.constant 0 : index
    %c0_17 = arith.constant 0 : index
    %27 = vector.load %arg6[%c0_16, %c0_17] : memref<256x128xbf16, #tpu.memory_space<vmem>>, vector<256x128xbf16>
    %cst_18 = arith.constant dense<0.000000e+00> : vector<8x128xf32>
    %28 = tpu.matmul %26, %27, %cst_18 {dimension_numbers = #tpu.dot_dimension_numbers<[1], [0], [0], [1], [0, 0, 1, 1], [], []>} : vector<8x256xbf16>, vector<256x128xbf16>, vector<8x128xf32> -> vector<8x128xf32>
    %c0_19 = arith.constant 0 : index
    %c0_20 = arith.constant 0 : index
    %29 = vector.load %arg7[%c0_19, %c0_20] : memref<1x128xf32, #tpu.memory_space<vmem>>, vector<1x128xf32>
    %30 = vector.broadcast %29 : vector<1x128xf32> to vector<8x128xf32>
    %31 = arith.addf %28, %30 : vector<8x128xf32>
    %32 = tpu.iota {dimensions = array<i32: 1>} : vector<8x128xi32>
    %c10_i32 = arith.constant 10 : i32
    %33 = vector.broadcast %c10_i32 : i32 to vector<8x128xi32>
    %34 = arith.cmpi slt, %32, %33 : vector<8x128xi32>
    %cst_21 = arith.constant -1.000000e+30 : f32
    %35 = vector.broadcast %cst_21 : f32 to vector<8x128xf32>
    %36 = arith.select %34, %31, %35 : vector<8x128xi1>, vector<8x128xf32>
    %cst_22 = arith.constant dense<0xFF800000> : vector<8xf32>
    %37 = vector.multi_reduction <maximumf>, %36, %cst_22 [1] : vector<8x128xf32> to vector<8xf32>
    %38 = vector.shape_cast %37 : vector<8xf32> to vector<8x1xf32>
    %39 = vector.broadcast %38 : vector<8x1xf32> to vector<8x128xf32>
    %40 = arith.subf %36, %39 : vector<8x128xf32>
    %41 = math.exp %40 : vector<8x128xf32>
    %cst_23 = arith.constant dense<0.000000e+00> : vector<8xf32>
    %42 = vector.multi_reduction <add>, %41, %cst_23 [1] : vector<8x128xf32> to vector<8xf32>
    %43 = vector.shape_cast %42 : vector<8xf32> to vector<8x1xf32>
    %44 = tpu.reciprocal %43 {approx = true} : vector<8x1xf32> -> vector<8x1xf32>
    %45 = vector.broadcast %44 : vector<8x1xf32> to vector<8x128xf32>
    %46 = arith.mulf %41, %45 : vector<8x128xf32>
    %c0_24 = arith.constant 0 : index
    %c0_25 = arith.constant 0 : index
    %47 = vector.load %arg8[%c0_24, %c0_25] : memref<8x128xf32, #tpu.memory_space<vmem>>, vector<8x128xf32>
    tpu.vector_store %arg8[%c0_24, %c0_25], %46 {strides = array<i32>} : memref<8x128xf32, #tpu.memory_space<vmem>>, vector<8x128xf32>,
    return
  }
  func.func @transform_0(%arg0: i32) -> (i32, i32) {
    %c0_i32 = arith.constant 0 : i32
    %c0_i32_0 = arith.constant 0 : i32
    return %arg0, %c0_i32 : i32, i32
  }
  func.func @transform_1(%arg0: i32) -> (i32, i32) {
    %c0_i32 = arith.constant 0 : i32
    %c0_i32_0 = arith.constant 0 : i32
    %c0_i32_1 = arith.constant 0 : i32
    return %c0_i32, %c0_i32_0 : i32, i32
  }
  func.func @transform_2(%arg0: i32) -> (i32, i32) {
    %c0_i32 = arith.constant 0 : i32
    %c0_i32_0 = arith.constant 0 : i32
    %c0_i32_1 = arith.constant 0 : i32
    return %c0_i32, %c0_i32_0 : i32, i32
  }
  func.func @transform_3(%arg0: i32) -> (i32, i32) {
    %c0_i32 = arith.constant 0 : i32
    %c0_i32_0 = arith.constant 0 : i32
    %c0_i32_1 = arith.constant 0 : i32
    return %c0_i32, %c0_i32_0 : i32, i32
  }
  func.func @transform_4(%arg0: i32) -> (i32, i32) {
    %c0_i32 = arith.constant 0 : i32
    %c0_i32_0 = arith.constant 0 : i32
    %c0_i32_1 = arith.constant 0 : i32
    return %c0_i32, %c0_i32_0 : i32, i32
  }
  func.func @transform_5(%arg0: i32) -> (i32, i32) {
    %c0_i32 = arith.constant 0 : i32
    %c0_i32_0 = arith.constant 0 : i32
    %c0_i32_1 = arith.constant 0 : i32
    return %c0_i32, %c0_i32_0 : i32, i32
  }
  func.func @transform_6(%arg0: i32) -> (i32, i32) {
    %c0_i32 = arith.constant 0 : i32
    %c0_i32_0 = arith.constant 0 : i32
    %c0_i32_1 = arith.constant 0 : i32
    return %c0_i32, %c0_i32_0 : i32, i32
  }
  func.func @transform_7(%arg0: i32) -> (i32, i32) {
    %c0_i32 = arith.constant 0 : i32
    %c0_i32_0 = arith.constant 0 : i32
    return %arg0, %c0_i32 : i32, i32
  }
}

</mosaic_0001>

<llo_original>
// kernel: tpu_custom_call.1
$region0: #{tpu_custom_call.1}
  #allocation0 [shape = 'u32[]', space=smem, size = 0x4, offset = 0x4, fixed_abs, tag = 'smem constant byte address 0x4 - core index']
  #allocation1 [shape = 'u32[72,128]{1,0:T(1,128)}', space=vmem, size = 0x9000, scoped, tag = 'internal scratch']
  %s0 = inlined_call_operand.hbm [shape: bf16[8,896], index: 0, kind: input, shape index: {}]
  %s1 = inlined_call_operand.hbm [shape: bf16[896,384], index: 1, kind: input, shape index: {}]
  %s2 = inlined_call_operand.hbm [shape: f32[1,384], index: 2, kind: input, shape index: {}]
  %s3 = inlined_call_operand.hbm [shape: bf16[384,256], index: 3, kind: input, shape index: {}]
  %s4 = inlined_call_operand.vmem [shape: f32[1,256], index: 4, kind: input, shape index: {}]
  %s5 = inlined_call_operand.hbm [shape: bf16[256,128], index: 5, kind: input, shape index: {}]
  %s6 = inlined_call_operand.vmem [shape: f32[1,128], index: 6, kind: input, shape index: {}]
  %s7 = inlined_call_operand.hbm [shape: f32[8,128], index: 7, kind: output, shape index: {}]
  %s8 = sld [smem:[#allocation0]]
  $region58: #{tpu_custom_call.1} parent=0
    _
  %s10 = ssub.s32 1, %s8
  %s11 = scalar_select 0, %s10, %s8
  $region1: #{tpu_custom_call.1} parent=0
    #allocation2 [shape = 'u8[14336]{0}', space=vmem, size = 0x3800, scoped, tag = 'input window, operand 0, single buffered']
    #allocation3 [shape = 's32[1]{0}', space=sflag, size = 0x4, scoped, tag = 'scoped memory for tpu_custom_call.1']
    #allocation4 [shape = 's32[1]{0}', space=sflag, size = 0x4, scoped, tag = 'scoped memory for tpu_custom_call.1']
    #allocation5 [shape = 'u8[688128]{0}', space=vmem, size = 0xa8000, scoped, tag = 'input window, operand 1, single buffered']
    #allocation6 [shape = 's32[1]{0}', space=sflag, size = 0x4, scoped, tag = 'scoped memory for tpu_custom_call.1']
    #allocation7 [shape = 'u8[1536]{0}', space=vmem, size = 0x800, scoped, tag = 'input window, operand 2, single buffered']
    #allocation8 [shape = 'u8[196608]{0}', space=vmem, size = 0x30000, scoped, tag = 'input window, operand 3, single buffered']
    #allocation9 [shape = 's32[1]{0}', space=sflag, size = 0x4, scoped, tag = 'scoped memory for tpu_custom_call.1']
    #allocation10 [shape = 'u8[65536]{0}', space=vmem, size = 0x10000, scoped, tag = 'input window, operand 5, single buffered']
    #allocation11 [shape = 'u8[4096]{0}', space=vmem, size = 0x1000, scoped, tag = 'output window, operand 0, single buffered']
    %12 = vsyncpa [#allocation3], 0
    %13 = vsyncpa [#allocation6], 0
    %14 = vsyncpa [#allocation9], 0
    %15 = vsyncpa [#allocation4], 0
    // Predicated region
    $region2: #{tpu_custom_call.1} parent=1 // pred_check
      _
    $region3: #{tpu_custom_call.1} parent=1 // pred_check_branch
      %17 = sbr.rel (0) target = $region5
    $region4: #{tpu_custom_call.1} parent=1 // pred_region
      %19 = vsyncadd [#allocation3], 0
      %s21 = sshll.u32 %s0, 4
      %s22 = int_to_ptr.hbm [resolvable:$true] %s21
      %s23 = sshll.u32 [#allocation2], 4
      %s24 = int_to_ptr.vmem [resolvable:$true] %s23
      %26 = dma.hbm_to_vmem [thread:$0]  %s22, 448, %s24, [#allocation3]
    $region5: #{tpu_custom_call.1} parent=1 // pred_fallthru
      _
    // Predicated region
    $region6: #{tpu_custom_call.1} parent=1 // pred_check
      _
    $region7: #{tpu_custom_call.1} parent=1 // pred_check_branch
      %28 = sbr.rel (0) target = $region9
    $region8: #{tpu_custom_call.1} parent=1 // pred_region
      %30 = vsyncadd [#allocation6], 0
      %s31 = sshll.u32 %s1, 4
      %s32 = int_to_ptr.hbm [resolvable:$true] %s31
      %s33 = sshll.u32 [#allocation5], 4
      %s34 = int_to_ptr.vmem [resolvable:$true] %s33
      %39 = dma.hbm_to_vmem [thread:$0]  %s32, 21504, %s34, [#allocation6], 192, 192, 12
    $region9: #{tpu_custom_call.1} parent=1 // pred_fallthru
      _
    // Predicated region
    $region10: #{tpu_custom_call.1} parent=1 // pred_check
      _
    $region11: #{tpu_custom_call.1} parent=1 // pred_check_branch
      %41 = sbr.rel (0) target = $region13
    $region12: #{tpu_custom_call.1} parent=1 // pred_region
      %43 = vsyncadd [#allocation6], 0
      %s45 = sshll.u32 %s2, 4
      %s46 = int_to_ptr.hbm [resolvable:$true] %s45
      %s47 = sshll.u32 [#allocation7], 4
      %s48 = int_to_ptr.vmem [resolvable:$true] %s47
      %50 = dma.hbm_to_vmem [thread:$0]  %s46, 48, %s48, [#allocation6]
    $region13: #{tpu_custom_call.1} parent=1 // pred_fallthru
      _
    // Predicated region
    $region14: #{tpu_custom_call.1} parent=1 // pred_check
      _
    $region15: #{tpu_custom_call.1} parent=1 // pred_check_branch
      %52 = sbr.rel (0) target = $region17
    $region16: #{tpu_custom_call.1} parent=1 // pred_region
      %54 = vsyncadd [#allocation9], 0
      %s55 = sshll.u32 %s3, 4
      %s56 = int_to_ptr.hbm [resolvable:$true] %s55
      %s57 = sshll.u32 [#allocation8], 4
      %s58 = int_to_ptr.vmem [resolvable:$true] %s57
      %63 = dma.hbm_to_vmem [thread:$0]  %s56, 6144, %s58, [#allocation9], 128, 128, 8
    $region17: #{tpu_custom_call.1} parent=1 // pred_fallthru
      _
    // Predicated region
    $region18: #{tpu_custom_call.1} parent=1 // pred_check
      _
    $region19: #{tpu_custom_call.1} parent=1 // pred_check_branch
      %65 = sbr.rel (0) target = $region21
    $region20: #{tpu_custom_call.1} parent=1 // pred_region
      _
    $region21: #{tpu_custom_call.1} parent=1 // pred_fallthru
      _
    // Predicated region
    $region22: #{tpu_custom_call.1} parent=1 // pred_check
      _
    $region23: #{tpu_custom_call.1} parent=1 // pred_check_branch
      %67 = sbr.rel (0) target = $region25
    $region24: #{tpu_custom_call.1} parent=1 // pred_region
      %69 = vsyncadd [#allocation9], 0
      %s70 = sshll.u32 %s5, 4
      %s71 = int_to_ptr.hbm [resolvable:$true] %s70
      %s72 = sshll.u32 [#allocation10], 4
      %s73 = int_to_ptr.vmem [resolvable:$true] %s72
      %78 = dma.hbm_to_vmem [thread:$0]  %s71, 2048, %s73, [#allocation9], 64, 64, 4
    $region25: #{tpu_custom_call.1} parent=1 // pred_fallthru
      _
    // Predicated region
    $region26: #{tpu_custom_call.1} parent=1 // pred_check
      _
    $region27: #{tpu_custom_call.1} parent=1 // pred_check_branch
      %80 = sbr.rel (0) target = $region29
    $region28: #{tpu_custom_call.1} parent=1 // pred_region
      _
    $region29: #{tpu_custom_call.1} parent=1 // pred_fallthru
      _
    // Predicated region
    $region30: #{tpu_custom_call.1} parent=1 // pred_check
      _
    $region31: #{tpu_custom_call.1} parent=1 // pred_check_branch
      %82 = sbr.rel (0) target = $region33
    $region32: #{tpu_custom_call.1} parent=1 // pred_region
      %84 = dma.done [#allocation3], 448
    $region33: #{tpu_custom_call.1} parent=1 // pred_fallthru
      _
    // Predicated region
    $region34: #{tpu_custom_call.1} parent=1 // pred_check
      _
    $region35: #{tpu_custom_call.1} parent=1 // pred_check_branch
      %86 = sbr.rel (0) target = $region37
    $region36: #{tpu_custom_call.1} parent=1 // pred_region
      %88 = dma.done [#allocation6], 21504
    $region37: #{tpu_custom_call.1} parent=1 // pred_fallthru
      _
    // Predicated region
    $region38: #{tpu_custom_call.1} parent=1 // pred_check
      _
    $region39: #{tpu_custom_call.1} parent=1 // pred_check_branch
      %90 = sbr.rel (0) target = $region41
    $region40: #{tpu_custom_call.1} parent=1 // pred_region
      %92 = dma.done [#allocation6], 48
    $region41: #{tpu_custom_call.1} parent=1 // pred_fallthru
      _
    // Predicated region
    $region42: #{tpu_custom_call.1} parent=1 // pred_check
      _
    $region43: #{tpu_custom_call.1} parent=1 // pred_check_branch
      %94 = sbr.rel (0) target = $region45
    $region44: #{tpu_custom_call.1} parent=1 // pred_region
      %96 = dma.done [#allocation9], 6144
    $region45: #{tpu_custom_call.1} parent=1 // pred_fallthru
      _
    // Predicated region
    $region46: #{tpu_custom_call.1} parent=1 // pred_check
      _
    $region47: #{tpu_custom_call.1} parent=1 // pred_check_branch
      %98 = sbr.rel (0) target = $region49
    $region48: #{tpu_custom_call.1} parent=1 // pred_region
      %100 = dma.done [#allocation9], 2048
    $region49: #{tpu_custom_call.1} parent=1 // pred_fallthru
      _
    %v101 = vld [vmem:[#allocation2] sm:$0xff]
    %v102 = vld [vmem:[#allocation2 + $0x8] sm:$0xff]
    %v103 = vld [vmem:[#allocation2 + $0x10] sm:$0xff]
    %v104 = vld [vmem:[#allocation2 + $0x18] sm:$0xf]
    %v105 = vld [vmem:[#allocation5] sm:$0xff]
    %v106 = vld [vmem:[#allocation5 + $0x8] sm:$0xf]
    %v107 = vld [vmem:[#allocation5 + $0xc] sm:$0xff]
    %v108 = vld [vmem:[#allocation5 + $0x14] sm:$0xf]
    %v109 = vld [vmem:[#allocation5 + $0x18] sm:$0xff]
    %v110 = vld [vmem:[#allocation5 + $0x20] sm:$0xf]
    %v111 = vld [vmem:[#allocation5 + $0x24] sm:$0xff]
    %v112 = vld [vmem:[#allocation5 + $0x2c] sm:$0xf]
    %v113 = vld [vmem:[#allocation5 + $0x30] sm:$0xff]
    %v114 = vld [vmem:[#allocation5 + $0x38] sm:$0xf]
    %v115 = vld [vmem:[#allocation5 + $0x3c] sm:$0xff]
    %v116 = vld [vmem:[#allocation5 + $0x44] sm:$0xf]
    %v117 = vld [vmem:[#allocation5 + $0x48] sm:$0xff]
    %v118 = vld [vmem:[#allocation5 + $0x50] sm:$0xf]
    %v119 = vld [vmem:[#allocation5 + $0x54] sm:$0xff]
    %v120 = vld [vmem:[#allocation5 + $0x5c] sm:$0xf]
    %v121 = vld [vmem:[#allocation5 + $0x60] sm:$0xff]
    %v122 = vld [vmem:[#allocation5 + $0x68] sm:$0xf]
    %v123 = vld [vmem:[#allocation5 + $0x6c] sm:$0xff]
    %v124 = vld [vmem:[#allocation5 + $0x74] sm:$0xf]
    %v125 = vld [vmem:[#allocation5 + $0x78] sm:$0xff]
    %v126 = vld [vmem:[#allocation5 + $0x80] sm:$0xf]
    %v127 = vld [vmem:[#allocation5 + $0x84] sm:$0xff]
    %v128 = vld [vmem:[#allocation5 + $0x8c] sm:$0xf]
    %v129 = vld [vmem:[#allocation5 + $0x90] sm:$0xff]
    %v130 = vld [vmem:[#allocation5 + $0x98] sm:$0xf]
    %v131 = vld [vmem:[#allocation5 + $0x9c] sm:$0xff]
    %v132 = vld [vmem:[#allocation5 + $0xa4] sm:$0xf]
    %v133 = vld [vmem:[#allocation5 + $0xa8] sm:$0xff]
    %v134 = vld [vmem:[#allocation5 + $0xb0] sm:$0xf]
    %v135 = vld [vmem:[#allocation5 + $0xb4] sm:$0xff]
    %v136 = vld [vmem:[#allocation5 + $0xbc] sm:$0xf]
    %v137 = vld [vmem:[#allocation5 + $0xc0] sm:$0xff]
    %v138 = vld [vmem:[#allocation5 + $0xc8] sm:$0xf]
    %v139 = vld [vmem:[#allocation5 + $0xcc] sm:$0xff]
    %v140 = vld [vmem:[#allocation5 + $0xd4] sm:$0xf]
    %v141 = vld [vmem:[#allocation5 + $0xd8] sm:$0xff]
    %v142 = vld [vmem:[#allocation5 + $0xe0] sm:$0xf]
    %v143 = vld [vmem:[#allocation5 + $0xe4] sm:$0xff]
    %v144 = vld [vmem:[#allocation5 + $0xec] sm:$0xf]
    %v145 = vld [vmem:[#allocation5 + $0xf0] sm:$0xff]
    %v146 = vld [vmem:[#allocation5 + $0xf8] sm:$0xf]
    %v147 = vld [vmem:[#allocation5 + $0xfc] sm:$0xff]
    %v148 = vld [vmem:[#allocation5 + $0x104] sm:$0xf]
    %v149 = vld [vmem:[#allocation5 + $0x108] sm:$0xff]
    %v150 = vld [vmem:[#allocation5 + $0x110] sm:$0xf]
    %v151 = vld [vmem:[#allocation5 + $0x114] sm:$0xff]
    %v152 = vld [vmem:[#allocation5 + $0x11c] sm:$0xf]
    %v153 = vld [vmem:[#allocation5 + $0x120] sm:$0xff]
    %v154 = vld [vmem:[#allocation5 + $0x128] sm:$0xf]
    %v155 = vld [vmem:[#allocation5 + $0x12c] sm:$0xff]
    %v156 = vld [vmem:[#allocation5 + $0x134] sm:$0xf]
    %v157 = vld [vmem:[#allocation5 + $0x138] sm:$0xff]
    %v158 = vld [vmem:[#allocation5 + $0x140] sm:$0xf]
    %v159 = vld [vmem:[#allocation5 + $0x144] sm:$0xff]
    %v160 = vld [vmem:[#allocation5 + $0x14c] sm:$0xf]
    %v161 = vld [vmem:[#allocation5 + $0x150] sm:$0xff]
    %v162 = vld [vmem:[#allocation5 + $0x158] sm:$0xf]
    %v163 = vld [vmem:[#allocation5 + $0x15c] sm:$0xff]
    %v164 = vld [vmem:[#allocation5 + $0x164] sm:$0xf]
    %v165 = vld [vmem:[#allocation5 + $0x168] sm:$0xff]
    %v166 = vld [vmem:[#allocation5 + $0x170] sm:$0xf]
    %v167 = vld [vmem:[#allocation5 + $0x174] sm:$0xff]
    %v168 = vld [vmem:[#allocation5 + $0x17c] sm:$0xf]
    %v169 = vld [vmem:[#allocation5 + $0x180] sm:$0xff]
    %v170 = vld [vmem:[#allocation5 + $0x188] sm:$0xf]
    %v171 = vld [vmem:[#allocation5 + $0x18c] sm:$0xff]
    %v172 = vld [vmem:[#allocation5 + $0x194] sm:$0xf]
    %v173 = vld [vmem:[#allocation5 + $0x198] sm:$0xff]
    %v174 = vld [vmem:[#allocation5 + $0x1a0] sm:$0xf]
    %v175 = vld [vmem:[#allocation5 + $0x1a4] sm:$0xff]
    %v176 = vld [vmem:[#allocation5 + $0x1ac] sm:$0xf]
    %v177 = vld [vmem:[#allocation5 + $0x1b0] sm:$0xff]
    %v178 = vld [vmem:[#allocation5 + $0x1b8] sm:$0xf]
    %v179 = vld [vmem:[#allocation5 + $0x1bc] sm:$0xff]
    %v180 = vld [vmem:[#allocation5 + $0x1c4] sm:$0xf]
    %v181 = vld [vmem:[#allocation5 + $0x1c8] sm:$0xff]
    %v182 = vld [vmem:[#allocation5 + $0x1d0] sm:$0xf]
    %v183 = vld [vmem:[#allocation5 + $0x1d4] sm:$0xff]
    %v184 = vld [vmem:[#allocation5 + $0x1dc] sm:$0xf]
    %v185 = vld [vmem:[#allocation5 + $0x1e0] sm:$0xff]
    %v186 = vld [vmem:[#allocation5 + $0x1e8] sm:$0xf]
    %v187 = vld [vmem:[#allocation5 + $0x1ec] sm:$0xff]
    %v188 = vld [vmem:[#allocation5 + $0x1f4] sm:$0xf]
    %v189 = vld [vmem:[#allocation5 + $0x1f8] sm:$0xff]
    %v190 = vld [vmem:[#allocation5 + $0x200] sm:$0xf]
    %v191 = vld [vmem:[#allocation5 + $0x204] sm:$0xff]
    %v192 = vld [vmem:[#allocation5 + $0x20c] sm:$0xf]
    %v193 = vld [vmem:[#allocation5 + $0x210] sm:$0xff]
    %v194 = vld [vmem:[#allocation5 + $0x218] sm:$0xf]
    %v195 = vld [vmem:[#allocation5 + $0x21c] sm:$0xff]
    %v196 = vld [vmem:[#allocation5 + $0x224] sm:$0xf]
    %v197 = vld [vmem:[#allocation5 + $0x228] sm:$0xff]
    %v198 = vld [vmem:[#allocation5 + $0x230] sm:$0xf]
    %v199 = vld [vmem:[#allocation5 + $0x234] sm:$0xff]
    %v200 = vld [vmem:[#allocation5 + $0x23c] sm:$0xf]
    %v201 = vld [vmem:[#allocation5 + $0x240] sm:$0xff]
    %v202 = vld [vmem:[#allocation5 + $0x248] sm:$0xf]
    %v203 = vld [vmem:[#allocation5 + $0x24c] sm:$0xff]
    %v204 = vld [vmem:[#allocation5 + $0x254] sm:$0xf]
    %v205 = vld [vmem:[#allocation5 + $0x258] sm:$0xff]
    %v206 = vld [vmem:[#allocation5 + $0x260] sm:$0xf]
    %v207 = vld [vmem:[#allocation5 + $0x264] sm:$0xff]
    %v208 = vld [vmem:[#allocation5 + $0x26c] sm:$0xf]
    %v209 = vld [vmem:[#allocation5 + $0x270] sm:$0xff]
    %v210 = vld [vmem:[#allocation5 + $0x278] sm:$0xf]
    %v211 = vld [vmem:[#allocation5 + $0x27c] sm:$0xff]
    %v212 = vld [vmem:[#allocation5 + $0x284] sm:$0xf]
    %v213 = vld [vmem:[#allocation5 + $0x288] sm:$0xff]
    %v214 = vld [vmem:[#allocation5 + $0x290] sm:$0xf]
    %v215 = vld [vmem:[#allocation5 + $0x294] sm:$0xff]
    %v216 = vld [vmem:[#allocation5 + $0x29c] sm:$0xf]
    %v217 = vld [vmem:[#allocation5 + $0x2a0] sm:$0xff]
    %v218 = vld [vmem:[#allocation5 + $0x2a8] sm:$0xf]
    %v219 = vld [vmem:[#allocation5 + $0x2ac] sm:$0xff]
    %v220 = vld [vmem:[#allocation5 + $0x2b4] sm:$0xf]
    %v221 = vld [vmem:[#allocation5 + $0x2b8] sm:$0xff]
    %v222 = vld [vmem:[#allocation5 + $0x2c0] sm:$0xf]
    %v223 = vld [vmem:[#allocation5 + $0x2c4] sm:$0xff]
    %v224 = vld [vmem:[#allocation5 + $0x2cc] sm:$0xf]
    %v225 = vld [vmem:[#allocation5 + $0x2d0] sm:$0xff]
    %v226 = vld [vmem:[#allocation5 + $0x2d8] sm:$0xf]
    %v227 = vld [vmem:[#allocation5 + $0x2dc] sm:$0xff]
    %v228 = vld [vmem:[#allocation5 + $0x2e4] sm:$0xf]
    %v229 = vld [vmem:[#allocation5 + $0x2e8] sm:$0xff]
    %v230 = vld [vmem:[#allocation5 + $0x2f0] sm:$0xf]
    %v231 = vld [vmem:[#allocation5 + $0x2f4] sm:$0xff]
    %v232 = vld [vmem:[#allocation5 + $0x2fc] sm:$0xf]
    %v233 = vld [vmem:[#allocation5 + $0x300] sm:$0xff]
    %v234 = vld [vmem:[#allocation5 + $0x308] sm:$0xf]
    %v235 = vld [vmem:[#allocation5 + $0x30c] sm:$0xff]
    %v236 = vld [vmem:[#allocation5 + $0x314] sm:$0xf]
    %v237 = vld [vmem:[#allocation5 + $0x318] sm:$0xff]
    %v238 = vld [vmem:[#allocation5 + $0x320] sm:$0xf]
    %v239 = vld [vmem:[#allocation5 + $0x324] sm:$0xff]
    %v240 = vld [vmem:[#allocation5 + $0x32c] sm:$0xf]
    %v241 = vld [vmem:[#allocation5 + $0x330] sm:$0xff]
    %v242 = vld [vmem:[#allocation5 + $0x338] sm:$0xf]
    %v243 = vld [vmem:[#allocation5 + $0x33c] sm:$0xff]
    %v244 = vld [vmem:[#allocation5 + $0x344] sm:$0xf]
    %v245 = vld [vmem:[#allocation5 + $0x348] sm:$0xff]
    %v246 = vld [vmem:[#allocation5 + $0x350] sm:$0xf]
    %v247 = vld [vmem:[#allocation5 + $0x354] sm:$0xff]
    %v248 = vld [vmem:[#allocation5 + $0x35c] sm:$0xf]
    %v249 = vld [vmem:[#allocation5 + $0x360] sm:$0xff]
    %v250 = vld [vmem:[#allocation5 + $0x368] sm:$0xf]
    %v251 = vld [vmem:[#allocation5 + $0x36c] sm:$0xff]
    %v252 = vld [vmem:[#allocation5 + $0x374] sm:$0xf]
    %v253 = vld [vmem:[#allocation5 + $0x378] sm:$0xff]
    %v254 = vld [vmem:[#allocation5 + $0x380] sm:$0xf]
    %v255 = vld [vmem:[#allocation5 + $0x384] sm:$0xff]
    %v256 = vld [vmem:[#allocation5 + $0x38c] sm:$0xf]
    %v257 = vld [vmem:[#allocation5 + $0x390] sm:$0xff]
    %v258 = vld [vmem:[#allocation5 + $0x398] sm:$0xf]
    %v259 = vld [vmem:[#allocation5 + $0x39c] sm:$0xff]
    %v260 = vld [vmem:[#allocation5 + $0x3a4] sm:$0xf]
    %v261 = vld [vmem:[#allocation5 + $0x3a8] sm:$0xff]
    %v262 = vld [vmem:[#allocation5 + $0x3b0] sm:$0xf]
    %v263 = vld [vmem:[#allocation5 + $0x3b4] sm:$0xff]
    %v264 = vld [vmem:[#allocation5 + $0x3bc] sm:$0xf]
    %v265 = vld [vmem:[#allocation5 + $0x3c0] sm:$0xff]
    %v266 = vld [vmem:[#allocation5 + $0x3c8] sm:$0xf]
    %v267 = vld [vmem:[#allocation5 + $0x3cc] sm:$0xff]
    %v268 = vld [vmem:[#allocation5 + $0x3d4] sm:$0xf]
    %v269 = vld [vmem:[#allocation5 + $0x3d8] sm:$0xff]
    %v270 = vld [vmem:[#allocation5 + $0x3e0] sm:$0xf]
    %v271 = vld [vmem:[#allocation5 + $0x3e4] sm:$0xff]
    %v272 = vld [vmem:[#allocation5 + $0x3ec] sm:$0xf]
    %v273 = vld [vmem:[#allocation5 + $0x3f0] sm:$0xff]
    %v274 = vld [vmem:[#allocation5 + $0x3f8] sm:$0xf]
    %v275 = vld [vmem:[#allocation5 + $0x3fc] sm:$0xff]
    %v276 = vld [vmem:[#allocation5 + $0x404] sm:$0xf]
    %v277 = vld [vmem:[#allocation5 + $0x408] sm:$0xff]
    %v278 = vld [vmem:[#allocation5 + $0x410] sm:$0xf]
    %v279 = vld [vmem:[#allocation5 + $0x414] sm:$0xff]
    %v280 = vld [vmem:[#allocation5 + $0x41c] sm:$0xf]
    %v281 = vld [vmem:[#allocation5 + $0x420] sm:$0xff]
    %v282 = vld [vmem:[#allocation5 + $0x428] sm:$0xf]
    %v283 = vld [vmem:[#allocation5 + $0x42c] sm:$0xff]
    %v284 = vld [vmem:[#allocation5 + $0x434] sm:$0xf]
    %v285 = vld [vmem:[#allocation5 + $0x438] sm:$0xff]
    %v286 = vld [vmem:[#allocation5 + $0x440] sm:$0xf]
    %v287 = vld [vmem:[#allocation5 + $0x444] sm:$0xff]
    %v288 = vld [vmem:[#allocation5 + $0x44c] sm:$0xf]
    %v289 = vld [vmem:[#allocation5 + $0x450] sm:$0xff]
    %v290 = vld [vmem:[#allocation5 + $0x458] sm:$0xf]
    %v291 = vld [vmem:[#allocation5 + $0x45c] sm:$0xff]
    %v292 = vld [vmem:[#allocation5 + $0x464] sm:$0xf]
    %v293 = vld [vmem:[#allocation5 + $0x468] sm:$0xff]
    %v294 = vld [vmem:[#allocation5 + $0x470] sm:$0xf]
    %v295 = vld [vmem:[#allocation5 + $0x474] sm:$0xff]
    %v296 = vld [vmem:[#allocation5 + $0x47c] sm:$0xf]
    %v297 = vld [vmem:[#allocation5 + $0x480] sm:$0xff]
    %v298 = vld [vmem:[#allocation5 + $0x488] sm:$0xf]
    %v299 = vld [vmem:[#allocation5 + $0x48c] sm:$0xff]
    %v300 = vld [vmem:[#allocation5 + $0x494] sm:$0xf]
    %v301 = vld [vmem:[#allocation5 + $0x498] sm:$0xff]
    %v302 = vld [vmem:[#allocation5 + $0x4a0] sm:$0xf]
    %v303 = vld [vmem:[#allocation5 + $0x4a4] sm:$0xff]
    %v304 = vld [vmem:[#allocation5 + $0x4ac] sm:$0xf]
    %v305 = vld [vmem:[#allocation5 + $0x4b0] sm:$0xff]
    %v306 = vld [vmem:[#allocation5 + $0x4b8] sm:$0xf]
    %v307 = vld [vmem:[#allocation5 + $0x4bc] sm:$0xff]
    %v308 = vld [vmem:[#allocation5 + $0x4c4] sm:$0xf]
    %v309 = vld [vmem:[#allocation5 + $0x4c8] sm:$0xff]
    %v310 = vld [vmem:[#allocation5 + $0x4d0] sm:$0xf]
    %v311 = vld [vmem:[#allocation5 + $0x4d4] sm:$0xff]
    %v312 = vld [vmem:[#allocation5 + $0x4dc] sm:$0xf]
    %v313 = vld [vmem:[#allocation5 + $0x4e0] sm:$0xff]
    %v314 = vld [vmem:[#allocation5 + $0x4e8] sm:$0xf]
    %v315 = vld [vmem:[#allocation5 + $0x4ec] sm:$0xff]
    %v316 = vld [vmem:[#allocation5 + $0x4f4] sm:$0xf]
    %v317 = vld [vmem:[#allocation5 + $0x4f8] sm:$0xff]
    %v318 = vld [vmem:[#allocation5 + $0x500] sm:$0xf]
    %v319 = vld [vmem:[#allocation5 + $0x504] sm:$0xff]
    %v320 = vld [vmem:[#allocation5 + $0x50c] sm:$0xf]
    %v321 = vld [vmem:[#allocation5 + $0x510] sm:$0xff]
    %v322 = vld [vmem:[#allocation5 + $0x518] sm:$0xf]
    %v323 = vld [vmem:[#allocation5 + $0x51c] sm:$0xff]
    %v324 = vld [vmem:[#allocation5 + $0x524] sm:$0xf]
    %v325 = vld [vmem:[#allocation5 + $0x528] sm:$0xff]
    %v326 = vld [vmem:[#allocation5 + $0x530] sm:$0xf]
    %v327 = vld [vmem:[#allocation5 + $0x534] sm:$0xff]
    %v328 = vld [vmem:[#allocation5 + $0x53c] sm:$0xf]
    %v329 = vld [vmem:[#allocation7] sm:$0x7]
    %v331 = vperm.slane %v329, 0
    %v332 = vperm.slane %v329, 1
    %v333 = vperm.slane %v329, 2
    %v341 = vunpack.c.l.b16 %v101
    %v342 = vunpack.c.h.b16 %v101
    %v343 = vunpack.c.l.b16 %v102
    %v344 = vunpack.c.h.b16 %v102
    %v345 = vunpack.c.l.b16 %v103
    %v346 = vunpack.c.h.b16 %v103
    %v347 = vunpack.c.l.b16 %v104
    %v348 = vpack.c.b16 %v341, %v341
    %v349 = vpack.c.b16 %v342, %v342
    %v350 = vpack.c.b16 %v343, %v343
    %v351 = vpack.c.b16 %v344, %v344
    %v352 = vpack.c.b16 %v345, %v345
    %v353 = vpack.c.b16 %v346, %v346
    %v354 = vpack.c.b16 %v347, %v347
    %v586 = vunpack.c.l.b16 %v105
    %v587 = vunpack.c.h.b16 %v105
    %v588 = vunpack.c.l.b16 %v106
    %v589 = vunpack.c.l.b16 %v107
    %v590 = vunpack.c.h.b16 %v107
    %v591 = vunpack.c.l.b16 %v108
    %v592 = vunpack.c.l.b16 %v109
    %v593 = vunpack.c.h.b16 %v109
    %v594 = vunpack.c.l.b16 %v110
    %v595 = vunpack.c.l.b16 %v111
    %v596 = vunpack.c.h.b16 %v111
    %v597 = vunpack.c.l.b16 %v112
    %v598 = vunpack.c.l.b16 %v113
    %v599 = vunpack.c.h.b16 %v113
    %v600 = vunpack.c.l.b16 %v114
    %v601 = vunpack.c.l.b16 %v115
    %v602 = vunpack.c.h.b16 %v115
    %v603 = vunpack.c.l.b16 %v116
    %v604 = vunpack.c.l.b16 %v117
    %v605 = vunpack.c.h.b16 %v117
    %v606 = vunpack.c.l.b16 %v118
    %v607 = vunpack.c.l.b16 %v119
    %v608 = vunpack.c.h.b16 %v119
    %v609 = vunpack.c.l.b16 %v120
    %v610 = vunpack.c.l.b16 %v121
    %v611 = vunpack.c.h.b16 %v121
    %v612 = vunpack.c.l.b16 %v122
    %v613 = vunpack.c.l.b16 %v123
    %v614 = vunpack.c.h.b16 %v123
    %v615 = vunpack.c.l.b16 %v124
    %v616 = vunpack.c.l.b16 %v125
    %v617 = vunpack.c.h.b16 %v125
    %v618 = vunpack.c.l.b16 %v126
    %v619 = vunpack.c.l.b16 %v127
    %v620 = vunpack.c.h.b16 %v127
    %v621 = vunpack.c.l.b16 %v128
    %v622 = vunpack.c.l.b16 %v129
    %v623 = vunpack.c.h.b16 %v129
    %v624 = vunpack.c.l.b16 %v130
    %v625 = vunpack.c.l.b16 %v131
    %v626 = vunpack.c.h.b16 %v131
    %v627 = vunpack.c.l.b16 %v132
    %v628 = vunpack.c.l.b16 %v133
    %v629 = vunpack.c.h.b16 %v133
    %v630 = vunpack.c.l.b16 %v134
    %v631 = vunpack.c.l.b16 %v135
    %v632 = vunpack.c.h.b16 %v135
    %v633 = vunpack.c.l.b16 %v136
    %v634 = vunpack.c.l.b16 %v137
    %v635 = vunpack.c.h.b16 %v137
    %v636 = vunpack.c.l.b16 %v138
    %v637 = vunpack.c.l.b16 %v139
    %v638 = vunpack.c.h.b16 %v139
    %v639 = vunpack.c.l.b16 %v140
    %v640 = vunpack.c.l.b16 %v141
    %v641 = vunpack.c.h.b16 %v141
    %v642 = vunpack.c.l.b16 %v142
    %v643 = vunpack.c.l.b16 %v143
    %v644 = vunpack.c.h.b16 %v143
    %v645 = vunpack.c.l.b16 %v144
    %v646 = vunpack.c.l.b16 %v145
    %v647 = vunpack.c.h.b16 %v145
    %v648 = vunpack.c.l.b16 %v146
    %v649 = vunpack.c.l.b16 %v147
    %v650 = vunpack.c.h.b16 %v147
    %v651 = vunpack.c.l.b16 %v148
    %v652 = vunpack.c.l.b16 %v149
    %v653 = vunpack.c.h.b16 %v149
    %v654 = vunpack.c.l.b16 %v150
    %v655 = vunpack.c.l.b16 %v151
    %v656 = vunpack.c.h.b16 %v151
    %v657 = vunpack.c.l.b16 %v152
    %v658 = vunpack.c.l.b16 %v153
    %v659 = vunpack.c.h.b16 %v153
    %v660 = vunpack.c.l.b16 %v154
    %v661 = vunpack.c.l.b16 %v155
    %v662 = vunpack.c.h.b16 %v155
    %v663 = vunpack.c.l.b16 %v156
    %v664 = vunpack.c.l.b16 %v157
    %v665 = vunpack.c.h.b16 %v157
    %v666 = vunpack.c.l.b16 %v158
    %v667 = vunpack.c.l.b16 %v159
    %v668 = vunpack.c.h.b16 %v159
    %v669 = vunpack.c.l.b16 %v160
    %v670 = vunpack.c.l.b16 %v161
    %v671 = vunpack.c.h.b16 %v161
    %v672 = vunpack.c.l.b16 %v162
    %v673 = vunpack.c.l.b16 %v163
    %v674 = vunpack.c.h.b16 %v163
    %v675 = vunpack.c.l.b16 %v164
    %v676 = vunpack.c.l.b16 %v165
    %v677 = vunpack.c.h.b16 %v165
    %v678 = vunpack.c.l.b16 %v166
    %v679 = vunpack.c.l.b16 %v167
    %v680 = vunpack.c.h.b16 %v167
    %v681 = vunpack.c.l.b16 %v168
    %v682 = vunpack.c.l.b16 %v169
    %v683 = vunpack.c.h.b16 %v169
    %v684 = vunpack.c.l.b16 %v170
    %v685 = vunpack.c.l.b16 %v171
    %v686 = vunpack.c.h.b16 %v171
    %v687 = vunpack.c.l.b16 %v172
    %v688 = vunpack.c.l.b16 %v173
    %v689 = vunpack.c.h.b16 %v173
    %v690 = vunpack.c.l.b16 %v174
    %v691 = vunpack.c.l.b16 %v175
    %v692 = vunpack.c.h.b16 %v175
    %v693 = vunpack.c.l.b16 %v176
    %v694 = vunpack.c.l.b16 %v177
    %v695 = vunpack.c.h.b16 %v177
    %v696 = vunpack.c.l.b16 %v178
    %v697 = vunpack.c.l.b16 %v179
    %v698 = vunpack.c.h.b16 %v179
    %v699 = vunpack.c.l.b16 %v180
    %v700 = vunpack.c.l.b16 %v181
    %v701 = vunpack.c.h.b16 %v181
    %v702 = vunpack.c.l.b16 %v182
    %v703 = vunpack.c.l.b16 %v183
    %v704 = vunpack.c.h.b16 %v183
    %v705 = vunpack.c.l.b16 %v184
    %v706 = vunpack.c.l.b16 %v185
    %v707 = vunpack.c.h.b16 %v185
    %v708 = vunpack.c.l.b16 %v186
    %v709 = vunpack.c.l.b16 %v187
    %v710 = vunpack.c.h.b16 %v187
    %v711 = vunpack.c.l.b16 %v188
    %v712 = vunpack.c.l.b16 %v189
    %v713 = vunpack.c.h.b16 %v189
    %v714 = vunpack.c.l.b16 %v190
    %v715 = vunpack.c.l.b16 %v191
    %v716 = vunpack.c.h.b16 %v191
    %v717 = vunpack.c.l.b16 %v192
    %v718 = vunpack.c.l.b16 %v193
    %v719 = vunpack.c.h.b16 %v193
    %v720 = vunpack.c.l.b16 %v194
    %v721 = vunpack.c.l.b16 %v195
    %v722 = vunpack.c.h.b16 %v195
    %v723 = vunpack.c.l.b16 %v196
    %v724 = vunpack.c.l.b16 %v197
    %v725 = vunpack.c.h.b16 %v197
    %v726 = vunpack.c.l.b16 %v198
    %v727 = vunpack.c.l.b16 %v199
    %v728 = vunpack.c.h.b16 %v199
    %v729 = vunpack.c.l.b16 %v200
    %v730 = vunpack.c.l.b16 %v201
    %v731 = vunpack.c.h.b16 %v201
    %v732 = vunpack.c.l.b16 %v202
    %v733 = vunpack.c.l.b16 %v203
    %v734 = vunpack.c.h.b16 %v203
    %v735 = vunpack.c.l.b16 %v204
    %v736 = vunpack.c.l.b16 %v205
    %v737 = vunpack.c.h.b16 %v205
    %v738 = vunpack.c.l.b16 %v206
    %v739 = vunpack.c.l.b16 %v207
    %v740 = vunpack.c.h.b16 %v207
    %v741 = vunpack.c.l.b16 %v208
    %v742 = vunpack.c.l.b16 %v209
    %v743 = vunpack.c.h.b16 %v209
    %v744 = vunpack.c.l.b16 %v210
    %v745 = vunpack.c.l.b16 %v211
    %v746 = vunpack.c.h.b16 %v211
    %v747 = vunpack.c.l.b16 %v212
    %v748 = vunpack.c.l.b16 %v213
    %v749 = vunpack.c.h.b16 %v213
    %v750 = vunpack.c.l.b16 %v214
    %v751 = vunpack.c.l.b16 %v215
    %v752 = vunpack.c.h.b16 %v215
    %v753 = vunpack.c.l.b16 %v216
    %v754 = vunpack.c.l.b16 %v217
    %v755 = vunpack.c.h.b16 %v217
    %v756 = vunpack.c.l.b16 %v218
    %v757 = vunpack.c.l.b16 %v219
    %v758 = vunpack.c.h.b16 %v219
    %v759 = vunpack.c.l.b16 %v220
    %v760 = vunpack.c.l.b16 %v221
    %v761 = vunpack.c.h.b16 %v221
    %v762 = vunpack.c.l.b16 %v222
    %v763 = vunpack.c.l.b16 %v223
    %v764 = vunpack.c.h.b16 %v223
    %v765 = vunpack.c.l.b16 %v224
    %v766 = vunpack.c.l.b16 %v225
    %v767 = vunpack.c.h.b16 %v225
    %v768 = vunpack.c.l.b16 %v226
    %v769 = vunpack.c.l.b16 %v227
    %v770 = vunpack.c.h.b16 %v227
    %v771 = vunpack.c.l.b16 %v228
    %v772 = vunpack.c.l.b16 %v229
    %v773 = vunpack.c.h.b16 %v229
    %v774 = vunpack.c.l.b16 %v230
    %v775 = vunpack.c.l.b16 %v231
    %v776 = vunpack.c.h.b16 %v231
    %v777 = vunpack.c.l.b16 %v232
    %v778 = vunpack.c.l.b16 %v233
    %v779 = vunpack.c.h.b16 %v233
    %v780 = vunpack.c.l.b16 %v234
    %v781 = vunpack.c.l.b16 %v235
    %v782 = vunpack.c.h.b16 %v235
    %v783 = vunpack.c.l.b16 %v236
    %v784 = vunpack.c.l.b16 %v237
    %v785 = vunpack.c.h.b16 %v237
    %v786 = vunpack.c.l.b16 %v238
    %v787 = vunpack.c.l.b16 %v239
    %v788 = vunpack.c.h.b16 %v239
    %v789 = vunpack.c.l.b16 %v240
    %v790 = vunpack.c.l.b16 %v241
    %v791 = vunpack.c.h.b16 %v241
    %v792 = vunpack.c.l.b16 %v242
    %v793 = vunpack.c.l.b16 %v243
    %v794 = vunpack.c.h.b16 %v243
    %v795 = vunpack.c.l.b16 %v244
    %v796 = vunpack.c.l.b16 %v245
    %v797 = vunpack.c.h.b16 %v245
    %v798 = vunpack.c.l.b16 %v246
    %v799 = vunpack.c.l.b16 %v247
    %v800 = vunpack.c.h.b16 %v247
    %v801 = vunpack.c.l.b16 %v248
    %v802 = vunpack.c.l.b16 %v249
    %v803 = vunpack.c.h.b16 %v249
    %v804 = vunpack.c.l.b16 %v250
    %v805 = vunpack.c.l.b16 %v251
    %v806 = vunpack.c.h.b16 %v251
    %v807 = vunpack.c.l.b16 %v252
    %v808 = vunpack.c.l.b16 %v253
    %v809 = vunpack.c.h.b16 %v253
    %v810 = vunpack.c.l.b16 %v254
    %v811 = vunpack.c.l.b16 %v255
    %v812 = vunpack.c.h.b16 %v255
    %v813 = vunpack.c.l.b16 %v256
    %v814 = vunpack.c.l.b16 %v257
    %v815 = vunpack.c.h.b16 %v257
    %v816 = vunpack.c.l.b16 %v258
    %v817 = vunpack.c.l.b16 %v259
    %v818 = vunpack.c.h.b16 %v259
    %v819 = vunpack.c.l.b16 %v260
    %v820 = vunpack.c.l.b16 %v261
    %v821 = vunpack.c.h.b16 %v261
    %v822 = vunpack.c.l.b16 %v262
    %v823 = vunpack.c.l.b16 %v263
    %v824 = vunpack.c.h.b16 %v263
    %v825 = vunpack.c.l.b16 %v264
    %v826 = vunpack.c.l.b16 %v265
    %v827 = vunpack.c.h.b16 %v265
    %v828 = vunpack.c.l.b16 %v266
    %v829 = vunpack.c.l.b16 %v267
    %v830 = vunpack.c.h.b16 %v267
    %v831 = vunpack.c.l.b16 %v268
    %v832 = vunpack.c.l.b16 %v269
    %v833 = vunpack.c.h.b16 %v269
    %v834 = vunpack.c.l.b16 %v270
    %v835 = vunpack.c.l.b16 %v271
    %v836 = vunpack.c.h.b16 %v271
    %v837 = vunpack.c.l.b16 %v272
    %v838 = vunpack.c.l.b16 %v273
    %v839 = vunpack.c.h.b16 %v273
    %v840 = vunpack.c.l.b16 %v274
    %v841 = vunpack.c.l.b16 %v275
    %v842 = vunpack.c.h.b16 %v275
    %v843 = vunpack.c.l.b16 %v276
    %v844 = vunpack.c.l.b16 %v277
    %v845 = vunpack.c.h.b16 %v277
    %v846 = vunpack.c.l.b16 %v278
    %v847 = vunpack.c.l.b16 %v279
    %v848 = vunpack.c.h.b16 %v279
    %v849 = vunpack.c.l.b16 %v280
    %v850 = vunpack.c.l.b16 %v281
    %v851 = vunpack.c.h.b16 %v281
    %v852 = vunpack.c.l.b16 %v282
    %v853 = vunpack.c.l.b16 %v283
    %v854 = vunpack.c.h.b16 %v283
    %v855 = vunpack.c.l.b16 %v284
    %v856 = vunpack.c.l.b16 %v285
    %v857 = vunpack.c.h.b16 %v285
    %v858 = vunpack.c.l.b16 %v286
    %v859 = vunpack.c.l.b16 %v287
    %v860 = vunpack.c.h.b16 %v287
    %v861 = vunpack.c.l.b16 %v288
    %v862 = vunpack.c.l.b16 %v289
    %v863 = vunpack.c.h.b16 %v289
    %v864 = vunpack.c.l.b16 %v290
    %v865 = vunpack.c.l.b16 %v291
    %v866 = vunpack.c.h.b16 %v291
    %v867 = vunpack.c.l.b16 %v292
    %v868 = vunpack.c.l.b16 %v293
    %v869 = vunpack.c.h.b16 %v293
    %v870 = vunpack.c.l.b16 %v294
    %v871 = vunpack.c.l.b16 %v295
    %v872 = vunpack.c.h.b16 %v295
    %v873 = vunpack.c.l.b16 %v296
    %v874 = vunpack.c.l.b16 %v297
    %v875 = vunpack.c.h.b16 %v297
    %v876 = vunpack.c.l.b16 %v298
    %v877 = vunpack.c.l.b16 %v299
    %v878 = vunpack.c.h.b16 %v299
    %v879 = vunpack.c.l.b16 %v300
    %v880 = vunpack.c.l.b16 %v301
    %v881 = vunpack.c.h.b16 %v301
    %v882 = vunpack.c.l.b16 %v302
    %v883 = vunpack.c.l.b16 %v303
    %v884 = vunpack.c.h.b16 %v303
    %v885 = vunpack.c.l.b16 %v304
    %v886 = vunpack.c.l.b16 %v305
    %v887 = vunpack.c.h.b16 %v305
    %v888 = vunpack.c.l.b16 %v306
    %v889 = vunpack.c.l.b16 %v307
    %v890 = vunpack.c.h.b16 %v307
    %v891 = vunpack.c.l.b16 %v308
    %v892 = vunpack.c.l.b16 %v309
    %v893 = vunpack.c.h.b16 %v309
    %v894 = vunpack.c.l.b16 %v310
    %v895 = vunpack.c.l.b16 %v311
    %v896 = vunpack.c.h.b16 %v311
    %v897 = vunpack.c.l.b16 %v312
    %v898 = vunpack.c.l.b16 %v313
    %v899 = vunpack.c.h.b16 %v313
    %v900 = vunpack.c.l.b16 %v314
    %v901 = vunpack.c.l.b16 %v315
    %v902 = vunpack.c.h.b16 %v315
    %v903 = vunpack.c.l.b16 %v316
    %v904 = vunpack.c.l.b16 %v317
    %v905 = vunpack.c.h.b16 %v317
    %v906 = vunpack.c.l.b16 %v318
    %v907 = vunpack.c.l.b16 %v319
    %v908 = vunpack.c.h.b16 %v319
    %v909 = vunpack.c.l.b16 %v320
    %v910 = vunpack.c.l.b16 %v321
    %v911 = vunpack.c.h.b16 %v321
    %v912 = vunpack.c.l.b16 %v322
    %v913 = vunpack.c.l.b16 %v323
    %v914 = vunpack.c.h.b16 %v323
    %v915 = vunpack.c.l.b16 %v324
    %v916 = vunpack.c.l.b16 %v325
    %v917 = vunpack.c.h.b16 %v325
    %v918 = vunpack.c.l.b16 %v326
    %v919 = vunpack.c.l.b16 %v327
    %v920 = vunpack.c.h.b16 %v327
    %v921 = vunpack.c.l.b16 %v328
    %v922 = vpack.c.b16 %v589, %v586
    %v923 = vpack.c.b16 %v590, %v587
    %v924 = vpack.c.b16 %v591, %v588
    %v925 = vpack.c.b16 %v595, %v592
    %v926 = vpack.c.b16 %v596, %v593
    %v927 = vpack.c.b16 %v597, %v594
    %v928 = vpack.c.b16 %v601, %v598
    %v929 = vpack.c.b16 %v602, %v599
    %v930 = vpack.c.b16 %v603, %v600
    %v931 = vpack.c.b16 %v607, %v604
    %v932 = vpack.c.b16 %v608, %v605
    %v933 = vpack.c.b16 %v609, %v606
    %v934 = vpack.c.b16 %v613, %v610
    %v935 = vpack.c.b16 %v614, %v611
    %v936 = vpack.c.b16 %v615, %v612
    %v937 = vpack.c.b16 %v619, %v616
    %v938 = vpack.c.b16 %v620, %v617
    %v939 = vpack.c.b16 %v621, %v618
    %v940 = vpack.c.b16 %v625, %v622
    %v941 = vpack.c.b16 %v626, %v623
    %v942 = vpack.c.b16 %v627, %v624
    %v943 = vpack.c.b16 %v631, %v628
    %v944 = vpack.c.b16 %v632, %v629
    %v945 = vpack.c.b16 %v633, %v630
    %v946 = vpack.c.b16 %v637, %v634
    %v947 = vpack.c.b16 %v638, %v635
    %v948 = vpack.c.b16 %v639, %v636
    %v949 = vpack.c.b16 %v643, %v640
    %v950 = vpack.c.b16 %v644, %v641
    %v951 = vpack.c.b16 %v645, %v642
    %v952 = vpack.c.b16 %v649, %v646
    %v953 = vpack.c.b16 %v650, %v647
    %v954 = vpack.c.b16 %v651, %v648
    %v955 = vpack.c.b16 %v655, %v652
    %v956 = vpack.c.b16 %v656, %v653
    %v957 = vpack.c.b16 %v657, %v654
    %v958 = vpack.c.b16 %v661, %v658
    %v959 = vpack.c.b16 %v662, %v659
    %v960 = vpack.c.b16 %v663, %v660
    %v961 = vpack.c.b16 %v667, %v664
    %v962 = vpack.c.b16 %v668, %v665
    %v963 = vpack.c.b16 %v669, %v666
    %v964 = vpack.c.b16 %v673, %v670
    %v965 = vpack.c.b16 %v674, %v671
    %v966 = vpack.c.b16 %v675, %v672
    %v967 = vpack.c.b16 %v679, %v676
    %v968 = vpack.c.b16 %v680, %v677
    %v969 = vpack.c.b16 %v681, %v678
    %v970 = vpack.c.b16 %v685, %v682
    %v971 = vpack.c.b16 %v686, %v683
    %v972 = vpack.c.b16 %v687, %v684
    %v973 = vpack.c.b16 %v691, %v688
    %v974 = vpack.c.b16 %v692, %v689
    %v975 = vpack.c.b16 %v693, %v690
    %v976 = vpack.c.b16 %v697, %v694
    %v977 = vpack.c.b16 %v698, %v695
    %v978 = vpack.c.b16 %v699, %v696
    %v979 = vpack.c.b16 %v703, %v700
    %v980 = vpack.c.b16 %v704, %v701
    %v981 = vpack.c.b16 %v705, %v702
    %v982 = vpack.c.b16 %v709, %v706
    %v983 = vpack.c.b16 %v710, %v707
    %v984 = vpack.c.b16 %v711, %v708
    %v985 = vpack.c.b16 %v715, %v712
    %v986 = vpack.c.b16 %v716, %v713
    %v987 = vpack.c.b16 %v717, %v714
    %v988 = vpack.c.b16 %v721, %v718
    %v989 = vpack.c.b16 %v722, %v719
    %v990 = vpack.c.b16 %v723, %v720
    %v991 = vpack.c.b16 %v727, %v724
    %v992 = vpack.c.b16 %v728, %v725
    %v993 = vpack.c.b16 %v729, %v726
    %v994 = vpack.c.b16 %v733, %v730
    %v995 = vpack.c.b16 %v734, %v731
    %v996 = vpack.c.b16 %v735, %v732
    %v997 = vpack.c.b16 %v739, %v736
    %v998 = vpack.c.b16 %v740, %v737
    %v999 = vpack.c.b16 %v741, %v738
    %v1000 = vpack.c.b16 %v745, %v742
    %v1001 = vpack.c.b16 %v746, %v743
    %v1002 = vpack.c.b16 %v747, %v744
    %v1003 = vpack.c.b16 %v751, %v748
    %v1004 = vpack.c.b16 %v752, %v749
    %v1005 = vpack.c.b16 %v753, %v750
    %v1006 = vpack.c.b16 %v757, %v754
    %v1007 = vpack.c.b16 %v758, %v755
    %v1008 = vpack.c.b16 %v759, %v756
    %v1009 = vpack.c.b16 %v763, %v760
    %v1010 = vpack.c.b16 %v764, %v761
    %v1011 = vpack.c.b16 %v765, %v762
    %v1012 = vpack.c.b16 %v769, %v766
    %v1013 = vpack.c.b16 %v770, %v767
    %v1014 = vpack.c.b16 %v771, %v768
    %v1015 = vpack.c.b16 %v775, %v772
    %v1016 = vpack.c.b16 %v776, %v773
    %v1017 = vpack.c.b16 %v777, %v774
    %v1018 = vpack.c.b16 %v781, %v778
    %v1019 = vpack.c.b16 %v782, %v779
    %v1020 = vpack.c.b16 %v783, %v780
    %v1021 = vpack.c.b16 %v787, %v784
    %v1022 = vpack.c.b16 %v788, %v785
    %v1023 = vpack.c.b16 %v789, %v786
    %v1024 = vpack.c.b16 %v793, %v790
    %v1025 = vpack.c.b16 %v794, %v791
    %v1026 = vpack.c.b16 %v795, %v792
    %v1027 = vpack.c.b16 %v799, %v796
    %v1028 = vpack.c.b16 %v800, %v797
    %v1029 = vpack.c.b16 %v801, %v798
    %v1030 = vpack.c.b16 %v805, %v802
    %v1031 = vpack.c.b16 %v806, %v803
    %v1032 = vpack.c.b16 %v807, %v804
    %v1033 = vpack.c.b16 %v811, %v808
    %v1034 = vpack.c.b16 %v812, %v809
    %v1035 = vpack.c.b16 %v813, %v810
    %v1036 = vpack.c.b16 %v817, %v814
    %v1037 = vpack.c.b16 %v818, %v815
    %v1038 = vpack.c.b16 %v819, %v816
    %v1039 = vpack.c.b16 %v823, %v820
    %v1040 = vpack.c.b16 %v824, %v821
    %v1041 = vpack.c.b16 %v825, %v822
    %v1042 = vpack.c.b16 %v829, %v826
    %v1043 = vpack.c.b16 %v830, %v827
    %v1044 = vpack.c.b16 %v831, %v828
    %v1045 = vpack.c.b16 %v835, %v832
    %v1046 = vpack.c.b16 %v836, %v833
    %v1047 = vpack.c.b16 %v837, %v834
    %v1048 = vpack.c.b16 %v841, %v838
    %v1049 = vpack.c.b16 %v842, %v839
    %v1050 = vpack.c.b16 %v843, %v840
    %v1051 = vpack.c.b16 %v847, %v844
    %v1052 = vpack.c.b16 %v848, %v845
    %v1053 = vpack.c.b16 %v849, %v846
    %v1054 = vpack.c.b16 %v853, %v850
    %v1055 = vpack.c.b16 %v854, %v851
    %v1056 = vpack.c.b16 %v855, %v852
    %v1057 = vpack.c.b16 %v859, %v856
    %v1058 = vpack.c.b16 %v860, %v857
    %v1059 = vpack.c.b16 %v861, %v858
    %v1060 = vpack.c.b16 %v865, %v862
    %v1061 = vpack.c.b16 %v866, %v863
    %v1062 = vpack.c.b16 %v867, %v864
    %v1063 = vpack.c.b16 %v871, %v868
    %v1064 = vpack.c.b16 %v872, %v869
    %v1065 = vpack.c.b16 %v873, %v870
    %v1066 = vpack.c.b16 %v877, %v874
    %v1067 = vpack.c.b16 %v878, %v875
    %v1068 = vpack.c.b16 %v879, %v876
    %v1069 = vpack.c.b16 %v883, %v880
    %v1070 = vpack.c.b16 %v884, %v881
    %v1071 = vpack.c.b16 %v885, %v882
    %v1072 = vpack.c.b16 %v889, %v886
    %v1073 = vpack.c.b16 %v890, %v887
    %v1074 = vpack.c.b16 %v891, %v888
    %v1075 = vpack.c.b16 %v895, %v892
    %v1076 = vpack.c.b16 %v896, %v893
    %v1077 = vpack.c.b16 %v897, %v894
    %v1078 = vpack.c.b16 %v901, %v898
    %v1079 = vpack.c.b16 %v902, %v899
    %v1080 = vpack.c.b16 %v903, %v900
    %v1081 = vpack.c.b16 %v907, %v904
    %v1082 = vpack.c.b16 %v908, %v905
    %v1083 = vpack.c.b16 %v909, %v906
    %v1084 = vpack.c.b16 %v913, %v910
    %v1085 = vpack.c.b16 %v914, %v911
    %v1086 = vpack.c.b16 %v915, %v912
    %v1087 = vpack.c.b16 %v919, %v916
    %v1088 = vpack.c.b16 %v920, %v917
    %v1089 = vpack.c.b16 %v921, %v918
    %1258 = vmatpush.bf16.msra.mxu0 %v943
    %1259 = vmatpush.bf16.msra.mxu0 %v940
    %1260 = vmatpush.bf16.msra.mxu0 %v937
    %1261 = vmatpush.bf16.msra.mxu0 %v934
    %1262 = vmatpush.bf16.msra.mxu0 %v931
    %1263 = vmatpush.bf16.msra.mxu0 %v928
    %1264 = vmatpush.bf16.msra.mxu0 %v925
    %1265 = vmatpush.bf16.msra.mxu0 %v922
    %1266 = vmatmul.bf16.gmra.mxu0 %v348
    %v1267 = vpop.f32.mrf.mxu0
    %v1268 = vadd.f32 %v331, %v1267
    %v1269 = vpop.f32.mrf.mxu0
    %1270 = vdwg.mxu0
    %1271 = vmatpush.bf16.msra.mxu0 %v967
    %1272 = vmatpush.bf16.msra.mxu0 %v964
    %1273 = vmatpush.bf16.msra.mxu0 %v961
    %1274 = vmatpush.bf16.msra.mxu0 %v958
    %1275 = vmatpush.bf16.msra.mxu0 %v955
    %1276 = vmatpush.bf16.msra.mxu0 %v952
    %1277 = vmatpush.bf16.msra.mxu0 %v949
    %1278 = vmatpush.bf16.msra.mxu0 %v946
    %1279 = vmatmul.bf16.gmra.mxu0 %v349
    %v1280 = vpop.f32.mrf.mxu0
    %v1281 = vadd.f32 %v1268, %v1280
    %v1282 = vpop.f32.mrf.mxu0
    %1283 = vdwg.mxu0
    %1284 = vmatpush.bf16.msra.mxu0 %v991
    %1285 = vmatpush.bf16.msra.mxu0 %v988
    %1286 = vmatpush.bf16.msra.mxu0 %v985
    %1287 = vmatpush.bf16.msra.mxu0 %v982
    %1288 = vmatpush.bf16.msra.mxu0 %v979
    %1289 = vmatpush.bf16.msra.mxu0 %v976
    %1290 = vmatpush.bf16.msra.mxu0 %v973
    %1291 = vmatpush.bf16.msra.mxu0 %v970
    %1292 = vmatmul.bf16.gmra.mxu0 %v350
    %v1293 = vpop.f32.mrf.mxu0
    %v1294 = vadd.f32 %v1281, %v1293
    %v1295 = vpop.f32.mrf.mxu0
    %1296 = vdwg.mxu0
    %1297 = vmatpush.bf16.msra.mxu0 %v1015
    %1298 = vmatpush.bf16.msra.mxu0 %v1012
    %1299 = vmatpush.bf16.msra.mxu0 %v1009
    %1300 = vmatpush.bf16.msra.mxu0 %v1006
    %1301 = vmatpush.bf16.msra.mxu0 %v1003
    %1302 = vmatpush.bf16.msra.mxu0 %v1000
    %1303 = vmatpush.bf16.msra.mxu0 %v997
    %1304 = vmatpush.bf16.msra.mxu0 %v994
    %1305 = vmatmul.bf16.gmra.mxu0 %v351
    %v1306 = vpop.f32.mrf.mxu0
    %v1307 = vadd.f32 %v1294, %v1306
    %v1308 = vpop.f32.mrf.mxu0
    %1309 = vdwg.mxu0
    %1310 = vmatpush.bf16.msra.mxu0 %v1039
    %1311 = vmatpush.bf16.msra.mxu0 %v1036
    %1312 = vmatpush.bf16.msra.mxu0 %v1033
    %1313 = vmatpush.bf16.msra.mxu0 %v1030
    %1314 = vmatpush.bf16.msra.mxu0 %v1027
    %1315 = vmatpush.bf16.msra.mxu0 %v1024
    %1316 = vmatpush.bf16.msra.mxu0 %v1021
    %1317 = vmatpush.bf16.msra.mxu0 %v1018
    %1318 = vmatmul.bf16.gmra.mxu0 %v352
    %v1319 = vpop.f32.mrf.mxu0
    %v1320 = vadd.f32 %v1307, %v1319
    %v1321 = vpop.f32.mrf.mxu0
    %1322 = vdwg.mxu0
    %1323 = vmatpush.bf16.msra.mxu0 %v1063
    %1324 = vmatpush.bf16.msra.mxu0 %v1060
    %1325 = vmatpush.bf16.msra.mxu0 %v1057
    %1326 = vmatpush.bf16.msra.mxu0 %v1054
    %1327 = vmatpush.bf16.msra.mxu0 %v1051
    %1328 = vmatpush.bf16.msra.mxu0 %v1048
    %1329 = vmatpush.bf16.msra.mxu0 %v1045
    %1330 = vmatpush.bf16.msra.mxu0 %v1042
    %1331 = vmatmul.bf16.gmra.mxu0 %v353
    %v1332 = vpop.f32.mrf.mxu0
    %v1333 = vadd.f32 %v1320, %v1332
    %v1334 = vpop.f32.mrf.mxu0
    %1335 = vdwg.mxu0
    %1336 = vmatpush.bf16.msra.mxu0 %v1087
    %1337 = vmatpush.bf16.msra.mxu0 %v1084
    %1338 = vmatpush.bf16.msra.mxu0 %v1081
    %1339 = vmatpush.bf16.msra.mxu0 %v1078
    %1340 = vmatpush.bf16.msra.mxu0 %v1075
    %1341 = vmatpush.bf16.msra.mxu0 %v1072
    %1342 = vmatpush.bf16.msra.mxu0 %v1069
    %1343 = vmatpush.bf16.msra.mxu0 %v1066
    %1344 = vmatmul.bf16.gmra.mxu0 %v354
    %v1345 = vpop.f32.mrf.mxu0
    %v1346 = vadd.f32 %v1333, %v1345
    %v1347 = vpop.f32.mrf.mxu0
    %1348 = vdwg.mxu0
    %1349 = vmatpush.bf16.msra.mxu0 %v944
    %1350 = vmatpush.bf16.msra.mxu0 %v941
    %1351 = vmatpush.bf16.msra.mxu0 %v938
    %1352 = vmatpush.bf16.msra.mxu0 %v935
    %1353 = vmatpush.bf16.msra.mxu0 %v932
    %1354 = vmatpush.bf16.msra.mxu0 %v929
    %1355 = vmatpush.bf16.msra.mxu0 %v926
    %1356 = vmatpush.bf16.msra.mxu0 %v923
    %1357 = vmatmul.bf16.gmra.mxu0 %v348
    %v1358 = vpop.f32.mrf.mxu0
    %v1359 = vadd.f32 %v332, %v1358
    %v1360 = vpop.f32.mrf.mxu0
    %1361 = vdwg.mxu0
    %1362 = vmatpush.bf16.msra.mxu0 %v968
    %1363 = vmatpush.bf16.msra.mxu0 %v965
    %1364 = vmatpush.bf16.msra.mxu0 %v962
    %1365 = vmatpush.bf16.msra.mxu0 %v959
    %1366 = vmatpush.bf16.msra.mxu0 %v956
    %1367 = vmatpush.bf16.msra.mxu0 %v953
    %1368 = vmatpush.bf16.msra.mxu0 %v950
    %1369 = vmatpush.bf16.msra.mxu0 %v947
    %1370 = vmatmul.bf16.gmra.mxu0 %v349
    %v1371 = vpop.f32.mrf.mxu0
    %v1372 = vadd.f32 %v1359, %v1371
    %v1373 = vpop.f32.mrf.mxu0
    %1374 = vdwg.mxu0
    %1375 = vmatpush.bf16.msra.mxu0 %v992
    %1376 = vmatpush.bf16.msra.mxu0 %v989
    %1377 = vmatpush.bf16.msra.mxu0 %v986
    %1378 = vmatpush.bf16.msra.mxu0 %v983
    %1379 = vmatpush.bf16.msra.mxu0 %v980
    %1380 = vmatpush.bf16.msra.mxu0 %v977
    %1381 = vmatpush.bf16.msra.mxu0 %v974
    %1382 = vmatpush.bf16.msra.mxu0 %v971
    %1383 = vmatmul.bf16.gmra.mxu0 %v350
    %v1384 = vpop.f32.mrf.mxu0
    %v1385 = vadd.f32 %v1372, %v1384
    %v1386 = vpop.f32.mrf.mxu0
    %1387 = vdwg.mxu0
    %1388 = vmatpush.bf16.msra.mxu0 %v1016
    %1389 = vmatpush.bf16.msra.mxu0 %v1013
    %1390 = vmatpush.bf16.msra.mxu0 %v1010
    %1391 = vmatpush.bf16.msra.mxu0 %v1007
    %1392 = vmatpush.bf16.msra.mxu0 %v1004
    %1393 = vmatpush.bf16.msra.mxu0 %v1001
    %1394 = vmatpush.bf16.msra.mxu0 %v998
    %1395 = vmatpush.bf16.msra.mxu0 %v995
    %1396 = vmatmul.bf16.gmra.mxu0 %v351
    %v1397 = vpop.f32.mrf.mxu0
    %v1398 = vadd.f32 %v1385, %v1397
    %v1399 = vpop.f32.mrf.mxu0
    %1400 = vdwg.mxu0
    %1401 = vmatpush.bf16.msra.mxu0 %v1040
    %1402 = vmatpush.bf16.msra.mxu0 %v1037
    %1403 = vmatpush.bf16.msra.mxu0 %v1034
    %1404 = vmatpush.bf16.msra.mxu0 %v1031
    %1405 = vmatpush.bf16.msra.mxu0 %v1028
    %1406 = vmatpush.bf16.msra.mxu0 %v1025
    %1407 = vmatpush.bf16.msra.mxu0 %v1022
    %1408 = vmatpush.bf16.msra.mxu0 %v1019
    %1409 = vmatmul.bf16.gmra.mxu0 %v352
    %v1410 = vpop.f32.mrf.mxu0
    %v1411 = vadd.f32 %v1398, %v1410
    %v1412 = vpop.f32.mrf.mxu0
    %1413 = vdwg.mxu0
    %1414 = vmatpush.bf16.msra.mxu0 %v1064
    %1415 = vmatpush.bf16.msra.mxu0 %v1061
    %1416 = vmatpush.bf16.msra.mxu0 %v1058
    %1417 = vmatpush.bf16.msra.mxu0 %v1055
    %1418 = vmatpush.bf16.msra.mxu0 %v1052
    %1419 = vmatpush.bf16.msra.mxu0 %v1049
    %1420 = vmatpush.bf16.msra.mxu0 %v1046
    %1421 = vmatpush.bf16.msra.mxu0 %v1043
    %1422 = vmatmul.bf16.gmra.mxu0 %v353
    %v1423 = vpop.f32.mrf.mxu0
    %v1424 = vadd.f32 %v1411, %v1423
    %v1425 = vpop.f32.mrf.mxu0
    %1426 = vdwg.mxu0
    %1427 = vmatpush.bf16.msra.mxu0 %v1088
    %1428 = vmatpush.bf16.msra.mxu0 %v1085
    %1429 = vmatpush.bf16.msra.mxu0 %v1082
    %1430 = vmatpush.bf16.msra.mxu0 %v1079
    %1431 = vmatpush.bf16.msra.mxu0 %v1076
    %1432 = vmatpush.bf16.msra.mxu0 %v1073
    %1433 = vmatpush.bf16.msra.mxu0 %v1070
    %1434 = vmatpush.bf16.msra.mxu0 %v1067
    %1435 = vmatmul.bf16.gmra.mxu0 %v354
    %v1436 = vpop.f32.mrf.mxu0
    %v1437 = vadd.f32 %v1424, %v1436
    %v1438 = vpop.f32.mrf.mxu0
    %1439 = vdwg.mxu0
    %1440 = vmatpush.bf16.msra.mxu0 %v945
    %1441 = vmatpush.bf16.msra.mxu0 %v942
    %1442 = vmatpush.bf16.msra.mxu0 %v939
    %1443 = vmatpush.bf16.msra.mxu0 %v936
    %1444 = vmatpush.bf16.msra.mxu0 %v933
    %1445 = vmatpush.bf16.msra.mxu0 %v930
    %1446 = vmatpush.bf16.msra.mxu0 %v927
    %1447 = vmatpush.bf16.msra.mxu0 %v924
    %1448 = vmatmul.bf16.gmra.mxu0 %v348
    %v1449 = vpop.f32.mrf.mxu0
    %v1450 = vadd.f32 %v333, %v1449
    %v1451 = vpop.f32.mrf.mxu0
    %1452 = vdwg.mxu0
    %1453 = vmatpush.bf16.msra.mxu0 %v969
    %1454 = vmatpush.bf16.msra.mxu0 %v966
    %1455 = vmatpush.bf16.msra.mxu0 %v963
    %1456 = vmatpush.bf16.msra.mxu0 %v960
    %1457 = vmatpush.bf16.msra.mxu0 %v957
    %1458 = vmatpush.bf16.msra.mxu0 %v954
    %1459 = vmatpush.bf16.msra.mxu0 %v951
    %1460 = vmatpush.bf16.msra.mxu0 %v948
    %1461 = vmatmul.bf16.gmra.mxu0 %v349
    %v1462 = vpop.f32.mrf.mxu0
    %v1463 = vadd.f32 %v1450, %v1462
    %v1464 = vpop.f32.mrf.mxu0
    %1465 = vdwg.mxu0
    %1466 = vmatpush.bf16.msra.mxu0 %v993
    %1467 = vmatpush.bf16.msra.mxu0 %v990
    %1468 = vmatpush.bf16.msra.mxu0 %v987
    %1469 = vmatpush.bf16.msra.mxu0 %v984
    %1470 = vmatpush.bf16.msra.mxu0 %v981
    %1471 = vmatpush.bf16.msra.mxu0 %v978
    %1472 = vmatpush.bf16.msra.mxu0 %v975
    %1473 = vmatpush.bf16.msra.mxu0 %v972
    %1474 = vmatmul.bf16.gmra.mxu0 %v350
    %v1475 = vpop.f32.mrf.mxu0
    %v1476 = vadd.f32 %v1463, %v1475
    %v1477 = vpop.f32.mrf.mxu0
    %1478 = vdwg.mxu0
    %1479 = vmatpush.bf16.msra.mxu0 %v1017
    %1480 = vmatpush.bf16.msra.mxu0 %v1014
    %1481 = vmatpush.bf16.msra.mxu0 %v1011
    %1482 = vmatpush.bf16.msra.mxu0 %v1008
    %1483 = vmatpush.bf16.msra.mxu0 %v1005
    %1484 = vmatpush.bf16.msra.mxu0 %v1002
    %1485 = vmatpush.bf16.msra.mxu0 %v999
    %1486 = vmatpush.bf16.msra.mxu0 %v996
    %1487 = vmatmul.bf16.gmra.mxu0 %v351
    %v1488 = vpop.f32.mrf.mxu0
    %v1489 = vadd.f32 %v1476, %v1488
    %v1490 = vpop.f32.mrf.mxu0
    %1491 = vdwg.mxu0
    %1492 = vmatpush.bf16.msra.mxu0 %v1041
    %1493 = vmatpush.bf16.msra.mxu0 %v1038
    %1494 = vmatpush.bf16.msra.mxu0 %v1035
    %1495 = vmatpush.bf16.msra.mxu0 %v1032
    %1496 = vmatpush.bf16.msra.mxu0 %v1029
    %1497 = vmatpush.bf16.msra.mxu0 %v1026
    %1498 = vmatpush.bf16.msra.mxu0 %v1023
    %1499 = vmatpush.bf16.msra.mxu0 %v1020
    %1500 = vmatmul.bf16.gmra.mxu0 %v352
    %v1501 = vpop.f32.mrf.mxu0
    %v1502 = vadd.f32 %v1489, %v1501
    %v1503 = vpop.f32.mrf.mxu0
    %1504 = vdwg.mxu0
    %1505 = vmatpush.bf16.msra.mxu0 %v1065
    %1506 = vmatpush.bf16.msra.mxu0 %v1062
    %1507 = vmatpush.bf16.msra.mxu0 %v1059
    %1508 = vmatpush.bf16.msra.mxu0 %v1056
    %1509 = vmatpush.bf16.msra.mxu0 %v1053
    %1510 = vmatpush.bf16.msra.mxu0 %v1050
    %1511 = vmatpush.bf16.msra.mxu0 %v1047
    %1512 = vmatpush.bf16.msra.mxu0 %v1044
    %1513 = vmatmul.bf16.gmra.mxu0 %v353
    %v1514 = vpop.f32.mrf.mxu0
    %v1515 = vadd.f32 %v1502, %v1514
    %v1516 = vpop.f32.mrf.mxu0
    %1517 = vdwg.mxu0
    %1518 = vmatpush.bf16.msra.mxu0 %v1089
    %1519 = vmatpush.bf16.msra.mxu0 %v1086
    %1520 = vmatpush.bf16.msra.mxu0 %v1083
    %1521 = vmatpush.bf16.msra.mxu0 %v1080
    %1522 = vmatpush.bf16.msra.mxu0 %v1077
    %1523 = vmatpush.bf16.msra.mxu0 %v1074
    %1524 = vmatpush.bf16.msra.mxu0 %v1071
    %1525 = vmatpush.bf16.msra.mxu0 %v1068
    %1526 = vmatmul.bf16.gmra.mxu0 %v354
    %v1527 = vpop.f32.mrf.mxu0
    %v1528 = vadd.f32 %v1515, %v1527
    %v1529 = vpop.f32.mrf.mxu0
    %1530 = vdwg.mxu0
    %v1531 = vmul.f32 %v1346, 0.5
    %v1532 = vmul.f32 %v1437, 0.5
    %v1533 = vmul.f32 %v1528, 0.5
    %v1534 = vtanh.pop %v1531
    %v1535 = vtanh.pop %v1532
    %v1536 = vtanh.pop %v1533
    %v1537 = vmul.f32 %v1534, 0.5
    %v1538 = vmul.f32 %v1535, 0.5
    %v1539 = vmul.f32 %v1536, 0.5
    %v1540 = vadd.f32 %v1537, 0.5
    %v1541 = vadd.f32 %v1538, 0.5
    %v1542 = vadd.f32 %v1539, 0.5
    %v1543 = vpack.c.bf16 %v1540, %v1540
    %v1544 = vpack.c.bf16 %v1541, %v1541
    %v1545 = vpack.c.bf16 %v1542, %v1542
    %v1546 = vld [vmem:[#allocation8] sm:$0xff]
    %v1547 = vld [vmem:[#allocation8 + $0x8] sm:$0xff]
    %v1548 = vld [vmem:[#allocation8 + $0x10] sm:$0xff]
    %v1549 = vld [vmem:[#allocation8 + $0x18] sm:$0xff]
    %v1550 = vld [vmem:[#allocation8 + $0x20] sm:$0xff]
    %v1551 = vld [vmem:[#allocation8 + $0x28] sm:$0xff]
    %v1552 = vld [vmem:[#allocation8 + $0x30] sm:$0xff]
    %v1553 = vld [vmem:[#allocation8 + $0x38] sm:$0xff]
    %v1554 = vld [vmem:[#allocation8 + $0x40] sm:$0xff]
    %v1555 = vld [vmem:[#allocation8 + $0x48] sm:$0xff]
    %v1556 = vld [vmem:[#allocation8 + $0x50] sm:$0xff]
    %v1557 = vld [vmem:[#allocation8 + $0x58] sm:$0xff]
    %v1558 = vld [vmem:[#allocation8 + $0x60] sm:$0xff]
    %v1559 = vld [vmem:[#allocation8 + $0x68] sm:$0xff]
    %v1560 = vld [vmem:[#allocation8 + $0x70] sm:$0xff]
    %v1561 = vld [vmem:[#allocation8 + $0x78] sm:$0xff]
    %v1562 = vld [vmem:[#allocation8 + $0x80] sm:$0xff]
    %v1563 = vld [vmem:[#allocation8 + $0x88] sm:$0xff]
    %v1564 = vld [vmem:[#allocation8 + $0x90] sm:$0xff]
    %v1565 = vld [vmem:[#allocation8 + $0x98] sm:$0xff]
    %v1566 = vld [vmem:[#allocation8 + $0xa0] sm:$0xff]
    %v1567 = vld [vmem:[#allocation8 + $0xa8] sm:$0xff]
    %v1568 = vld [vmem:[#allocation8 + $0xb0] sm:$0xff]
    %v1569 = vld [vmem:[#allocation8 + $0xb8] sm:$0xff]
    %v1570 = vld [vmem:[#allocation8 + $0xc0] sm:$0xff]
    %v1571 = vld [vmem:[#allocation8 + $0xc8] sm:$0xff]
    %v1572 = vld [vmem:[#allocation8 + $0xd0] sm:$0xff]
    %v1573 = vld [vmem:[#allocation8 + $0xd8] sm:$0xff]
    %v1574 = vld [vmem:[#allocation8 + $0xe0] sm:$0xff]
    %v1575 = vld [vmem:[#allocation8 + $0xe8] sm:$0xff]
    %v1576 = vld [vmem:[#allocation8 + $0xf0] sm:$0xff]
    %v1577 = vld [vmem:[#allocation8 + $0xf8] sm:$0xff]
    %v1578 = vld [vmem:[#allocation8 + $0x100] sm:$0xff]
    %v1579 = vld [vmem:[#allocation8 + $0x108] sm:$0xff]
    %v1580 = vld [vmem:[#allocation8 + $0x110] sm:$0xff]
    %v1581 = vld [vmem:[#allocation8 + $0x118] sm:$0xff]
    %v1582 = vld [vmem:[#allocation8 + $0x120] sm:$0xff]
    %v1583 = vld [vmem:[#allocation8 + $0x128] sm:$0xff]
    %v1584 = vld [vmem:[#allocation8 + $0x130] sm:$0xff]
    %v1585 = vld [vmem:[#allocation8 + $0x138] sm:$0xff]
    %v1586 = vld [vmem:[#allocation8 + $0x140] sm:$0xff]
    %v1587 = vld [vmem:[#allocation8 + $0x148] sm:$0xff]
    %v1588 = vld [vmem:[#allocation8 + $0x150] sm:$0xff]
    %v1589 = vld [vmem:[#allocation8 + $0x158] sm:$0xff]
    %v1590 = vld [vmem:[#allocation8 + $0x160] sm:$0xff]
    %v1591 = vld [vmem:[#allocation8 + $0x168] sm:$0xff]
    %v1592 = vld [vmem:[#allocation8 + $0x170] sm:$0xff]
    %v1593 = vld [vmem:[#allocation8 + $0x178] sm:$0xff]
    %v1594 = vld [vmem:[%s4] sm:$0x3]
    %v1596 = vperm.slane %v1594, 0
    %v1597 = vperm.slane %v1594, 1
    %v1648 = vunpack.c.l.b16 %v1546
    %v1649 = vunpack.c.h.b16 %v1546
    %v1650 = vunpack.c.l.b16 %v1547
    %v1651 = vunpack.c.h.b16 %v1547
    %v1652 = vunpack.c.l.b16 %v1548
    %v1653 = vunpack.c.h.b16 %v1548
    %v1654 = vunpack.c.l.b16 %v1549
    %v1655 = vunpack.c.h.b16 %v1549
    %v1656 = vunpack.c.l.b16 %v1550
    %v1657 = vunpack.c.h.b16 %v1550
    %v1658 = vunpack.c.l.b16 %v1551
    %v1659 = vunpack.c.h.b16 %v1551
    %v1660 = vunpack.c.l.b16 %v1552
    %v1661 = vunpack.c.h.b16 %v1552
    %v1662 = vunpack.c.l.b16 %v1553
    %v1663 = vunpack.c.h.b16 %v1553
    %v1664 = vunpack.c.l.b16 %v1554
    %v1665 = vunpack.c.h.b16 %v1554
    %v1666 = vunpack.c.l.b16 %v1555
    %v1667 = vunpack.c.h.b16 %v1555
    %v1668 = vunpack.c.l.b16 %v1556
    %v1669 = vunpack.c.h.b16 %v1556
    %v1670 = vunpack.c.l.b16 %v1557
    %v1671 = vunpack.c.h.b16 %v1557
    %v1672 = vunpack.c.l.b16 %v1558
    %v1673 = vunpack.c.h.b16 %v1558
    %v1674 = vunpack.c.l.b16 %v1559
    %v1675 = vunpack.c.h.b16 %v1559
    %v1676 = vunpack.c.l.b16 %v1560
    %v1677 = vunpack.c.h.b16 %v1560
    %v1678 = vunpack.c.l.b16 %v1561
    %v1679 = vunpack.c.h.b16 %v1561
    %v1680 = vunpack.c.l.b16 %v1562
    %v1681 = vunpack.c.h.b16 %v1562
    %v1682 = vunpack.c.l.b16 %v1563
    %v1683 = vunpack.c.h.b16 %v1563
    %v1684 = vunpack.c.l.b16 %v1564
    %v1685 = vunpack.c.h.b16 %v1564
    %v1686 = vunpack.c.l.b16 %v1565
    %v1687 = vunpack.c.h.b16 %v1565
    %v1688 = vunpack.c.l.b16 %v1566
    %v1689 = vunpack.c.h.b16 %v1566
    %v1690 = vunpack.c.l.b16 %v1567
    %v1691 = vunpack.c.h.b16 %v1567
    %v1692 = vunpack.c.l.b16 %v1568
    %v1693 = vunpack.c.h.b16 %v1568
    %v1694 = vunpack.c.l.b16 %v1569
    %v1695 = vunpack.c.h.b16 %v1569
    %v1696 = vunpack.c.l.b16 %v1570
    %v1697 = vunpack.c.h.b16 %v1570
    %v1698 = vunpack.c.l.b16 %v1571
    %v1699 = vunpack.c.h.b16 %v1571
    %v1700 = vunpack.c.l.b16 %v1572
    %v1701 = vunpack.c.h.b16 %v1572
    %v1702 = vunpack.c.l.b16 %v1573
    %v1703 = vunpack.c.h.b16 %v1573
    %v1704 = vunpack.c.l.b16 %v1574
    %v1705 = vunpack.c.h.b16 %v1574
    %v1706 = vunpack.c.l.b16 %v1575
    %v1707 = vunpack.c.h.b16 %v1575
    %v1708 = vunpack.c.l.b16 %v1576
    %v1709 = vunpack.c.h.b16 %v1576
    %v1710 = vunpack.c.l.b16 %v1577
    %v1711 = vunpack.c.h.b16 %v1577
    %v1712 = vunpack.c.l.b16 %v1578
    %v1713 = vunpack.c.h.b16 %v1578
    %v1714 = vunpack.c.l.b16 %v1579
    %v1715 = vunpack.c.h.b16 %v1579
    %v1716 = vunpack.c.l.b16 %v1580
    %v1717 = vunpack.c.h.b16 %v1580
    %v1718 = vunpack.c.l.b16 %v1581
    %v1719 = vunpack.c.h.b16 %v1581
    %v1720 = vunpack.c.l.b16 %v1582
    %v1721 = vunpack.c.h.b16 %v1582
    %v1722 = vunpack.c.l.b16 %v1583
    %v1723 = vunpack.c.h.b16 %v1583
    %v1724 = vunpack.c.l.b16 %v1584
    %v1725 = vunpack.c.h.b16 %v1584
    %v1726 = vunpack.c.l.b16 %v1585
    %v1727 = vunpack.c.h.b16 %v1585
    %v1728 = vunpack.c.l.b16 %v1586
    %v1729 = vunpack.c.h.b16 %v1586
    %v1730 = vunpack.c.l.b16 %v1587
    %v1731 = vunpack.c.h.b16 %v1587
    %v1732 = vunpack.c.l.b16 %v1588
    %v1733 = vunpack.c.h.b16 %v1588
    %v1734 = vunpack.c.l.b16 %v1589
    %v1735 = vunpack.c.h.b16 %v1589
    %v1736 = vunpack.c.l.b16 %v1590
    %v1737 = vunpack.c.h.b16 %v1590
    %v1738 = vunpack.c.l.b16 %v1591
    %v1739 = vunpack.c.h.b16 %v1591
    %v1740 = vunpack.c.l.b16 %v1592
    %v1741 = vunpack.c.h.b16 %v1592
    %v1742 = vunpack.c.l.b16 %v1593
    %v1743 = vunpack.c.h.b16 %v1593
    %v1744 = vpack.c.b16 %v1650, %v1648
    %v1745 = vpack.c.b16 %v1651, %v1649
    %v1746 = vpack.c.b16 %v1654, %v1652
    %v1747 = vpack.c.b16 %v1655, %v1653
    %v1748 = vpack.c.b16 %v1658, %v1656
    %v1749 = vpack.c.b16 %v1659, %v1657
    %v1750 = vpack.c.b16 %v1662, %v1660
    %v1751 = vpack.c.b16 %v1663, %v1661
    %v1752 = vpack.c.b16 %v1666, %v1664
    %v1753 = vpack.c.b16 %v1667, %v1665
    %v1754 = vpack.c.b16 %v1670, %v1668
    %v1755 = vpack.c.b16 %v1671, %v1669
    %v1756 = vpack.c.b16 %v1674, %v1672
    %v1757 = vpack.c.b16 %v1675, %v1673
    %v1758 = vpack.c.b16 %v1678, %v1676
    %v1759 = vpack.c.b16 %v1679, %v1677
    %v1760 = vpack.c.b16 %v1682, %v1680
    %v1761 = vpack.c.b16 %v1683, %v1681
    %v1762 = vpack.c.b16 %v1686, %v1684
    %v1763 = vpack.c.b16 %v1687, %v1685
    %v1764 = vpack.c.b16 %v1690, %v1688
    %v1765 = vpack.c.b16 %v1691, %v1689
    %v1766 = vpack.c.b16 %v1694, %v1692
    %v1767 = vpack.c.b16 %v1695, %v1693
    %v1768 = vpack.c.b16 %v1698, %v1696
    %v1769 = vpack.c.b16 %v1699, %v1697
    %v1770 = vpack.c.b16 %v1702, %v1700
    %v1771 = vpack.c.b16 %v1703, %v1701
    %v1772 = vpack.c.b16 %v1706, %v1704
    %v1773 = vpack.c.b16 %v1707, %v1705
    %v1774 = vpack.c.b16 %v1710, %v1708
    %v1775 = vpack.c.b16 %v1711, %v1709
    %v1776 = vpack.c.b16 %v1714, %v1712
    %v1777 = vpack.c.b16 %v1715, %v1713
    %v1778 = vpack.c.b16 %v1718, %v1716
    %v1779 = vpack.c.b16 %v1719, %v1717
    %v1780 = vpack.c.b16 %v1722, %v1720
    %v1781 = vpack.c.b16 %v1723, %v1721
    %v1782 = vpack.c.b16 %v1726, %v1724
    %v1783 = vpack.c.b16 %v1727, %v1725
    %v1784 = vpack.c.b16 %v1730, %v1728
    %v1785 = vpack.c.b16 %v1731, %v1729
    %v1786 = vpack.c.b16 %v1734, %v1732
    %v1787 = vpack.c.b16 %v1735, %v1733
    %v1788 = vpack.c.b16 %v1738, %v1736
    %v1789 = vpack.c.b16 %v1739, %v1737
    %v1790 = vpack.c.b16 %v1742, %v1740
    %v1791 = vpack.c.b16 %v1743, %v1741
    %1840 = vmatpush.bf16.msra.mxu0 %v1758
    %1841 = vmatpush.bf16.msra.mxu0 %v1756
    %1842 = vmatpush.bf16.msra.mxu0 %v1754
    %1843 = vmatpush.bf16.msra.mxu0 %v1752
    %1844 = vmatpush.bf16.msra.mxu0 %v1750
    %1845 = vmatpush.bf16.msra.mxu0 %v1748
    %1846 = vmatpush.bf16.msra.mxu0 %v1746
    %1847 = vmatpush.bf16.msra.mxu0 %v1744
    %1848 = vmatmul.bf16.gmra.mxu0 %v1543
    %v1849 = vpop.f32.mrf.mxu0
    %v1850 = vadd.f32 %v1596, %v1849
    %v1851 = vpop.f32.mrf.mxu0
    %1852 = vdwg.mxu0
    %1853 = vmatpush.bf16.msra.mxu0 %v1774
    %1854 = vmatpush.bf16.msra.mxu0 %v1772
    %1855 = vmatpush.bf16.msra.mxu0 %v1770
    %1856 = vmatpush.bf16.msra.mxu0 %v1768
    %1857 = vmatpush.bf16.msra.mxu0 %v1766
    %1858 = vmatpush.bf16.msra.mxu0 %v1764
    %1859 = vmatpush.bf16.msra.mxu0 %v1762
    %1860 = vmatpush.bf16.msra.mxu0 %v1760
    %1861 = vmatmul.bf16.gmra.mxu0 %v1544
    %v1862 = vpop.f32.mrf.mxu0
    %v1863 = vadd.f32 %v1850, %v1862
    %v1864 = vpop.f32.mrf.mxu0
    %1865 = vdwg.mxu0
    %1866 = vmatpush.bf16.msra.mxu0 %v1790
    %1867 = vmatpush.bf16.msra.mxu0 %v1788
    %1868 = vmatpush.bf16.msra.mxu0 %v1786
    %1869 = vmatpush.bf16.msra.mxu0 %v1784
    %1870 = vmatpush.bf16.msra.mxu0 %v1782
    %1871 = vmatpush.bf16.msra.mxu0 %v1780
    %1872 = vmatpush.bf16.msra.mxu0 %v1778
    %1873 = vmatpush.bf16.msra.mxu0 %v1776
    %1874 = vmatmul.bf16.gmra.mxu0 %v1545
    %v1875 = vpop.f32.mrf.mxu0
    %v1876 = vadd.f32 %v1863, %v1875
    %v1877 = vpop.f32.mrf.mxu0
    %1878 = vdwg.mxu0
    %1879 = vmatpush.bf16.msra.mxu0 %v1759
    %1880 = vmatpush.bf16.msra.mxu0 %v1757
    %1881 = vmatpush.bf16.msra.mxu0 %v1755
    %1882 = vmatpush.bf16.msra.mxu0 %v1753
    %1883 = vmatpush.bf16.msra.mxu0 %v1751
    %1884 = vmatpush.bf16.msra.mxu0 %v1749
    %1885 = vmatpush.bf16.msra.mxu0 %v1747
    %1886 = vmatpush.bf16.msra.mxu0 %v1745
    %1887 = vmatmul.bf16.gmra.mxu0 %v1543
    %v1888 = vpop.f32.mrf.mxu0
    %v1889 = vadd.f32 %v1597, %v1888
    %v1890 = vpop.f32.mrf.mxu0
    %1891 = vdwg.mxu0
    %1892 = vmatpush.bf16.msra.mxu0 %v1775
    %1893 = vmatpush.bf16.msra.mxu0 %v1773
    %1894 = vmatpush.bf16.msra.mxu0 %v1771
    %1895 = vmatpush.bf16.msra.mxu0 %v1769
    %1896 = vmatpush.bf16.msra.mxu0 %v1767
    %1897 = vmatpush.bf16.msra.mxu0 %v1765
    %1898 = vmatpush.bf16.msra.mxu0 %v1763
    %1899 = vmatpush.bf16.msra.mxu0 %v1761
    %1900 = vmatmul.bf16.gmra.mxu0 %v1544
    %v1901 = vpop.f32.mrf.mxu0
    %v1902 = vadd.f32 %v1889, %v1901
    %v1903 = vpop.f32.mrf.mxu0
    %1904 = vdwg.mxu0
    %1905 = vmatpush.bf16.msra.mxu0 %v1791
    %1906 = vmatpush.bf16.msra.mxu0 %v1789
    %1907 = vmatpush.bf16.msra.mxu0 %v1787
    %1908 = vmatpush.bf16.msra.mxu0 %v1785
    %1909 = vmatpush.bf16.msra.mxu0 %v1783
    %1910 = vmatpush.bf16.msra.mxu0 %v1781
    %1911 = vmatpush.bf16.msra.mxu0 %v1779
    %1912 = vmatpush.bf16.msra.mxu0 %v1777
    %1913 = vmatmul.bf16.gmra.mxu0 %v1545
    %v1914 = vpop.f32.mrf.mxu0
    %v1915 = vadd.f32 %v1902, %v1914
    %v1916 = vpop.f32.mrf.mxu0
    %1917 = vdwg.mxu0
    %v1918 = vmul.f32 %v1876, 0.5
    %v1919 = vmul.f32 %v1915, 0.5
    %v1920 = vtanh.pop %v1918
    %v1921 = vtanh.pop %v1919
    %v1922 = vmul.f32 %v1920, 0.5
    %v1923 = vmul.f32 %v1921, 0.5
    %v1924 = vadd.f32 %v1922, 0.5
    %v1925 = vadd.f32 %v1923, 0.5
    %v1926 = vpack.c.bf16 %v1924, %v1924
    %v1927 = vpack.c.bf16 %v1925, %v1925
    %v1928 = vld [vmem:[#allocation10] sm:$0xf]
    %v1929 = vld [vmem:[#allocation10 + $0x4] sm:$0xf]
    %v1930 = vld [vmem:[#allocation10 + $0x8] sm:$0xf]
    %v1931 = vld [vmem:[#allocation10 + $0xc] sm:$0xf]
    %v1932 = vld [vmem:[#allocation10 + $0x10] sm:$0xf]
    %v1933 = vld [vmem:[#allocation10 + $0x14] sm:$0xf]
    %v1934 = vld [vmem:[#allocation10 + $0x18] sm:$0xf]
    %v1935 = vld [vmem:[#allocation10 + $0x1c] sm:$0xf]
    %v1936 = vld [vmem:[#allocation10 + $0x20] sm:$0xf]
    %v1937 = vld [vmem:[#allocation10 + $0x24] sm:$0xf]
    %v1938 = vld [vmem:[#allocation10 + $0x28] sm:$0xf]
    %v1939 = vld [vmem:[#allocation10 + $0x2c] sm:$0xf]
    %v1940 = vld [vmem:[#allocation10 + $0x30] sm:$0xf]
    %v1941 = vld [vmem:[#allocation10 + $0x34] sm:$0xf]
    %v1942 = vld [vmem:[#allocation10 + $0x38] sm:$0xf]
    %v1943 = vld [vmem:[#allocation10 + $0x3c] sm:$0xf]
    %v1944 = vld [vmem:[#allocation10 + $0x40] sm:$0xf]
    %v1945 = vld [vmem:[#allocation10 + $0x44] sm:$0xf]
    %v1946 = vld [vmem:[#allocation10 + $0x48] sm:$0xf]
    %v1947 = vld [vmem:[#allocation10 + $0x4c] sm:$0xf]
    %v1948 = vld [vmem:[#allocation10 + $0x50] sm:$0xf]
    %v1949 = vld [vmem:[#allocation10 + $0x54] sm:$0xf]
    %v1950 = vld [vmem:[#allocation10 + $0x58] sm:$0xf]
    %v1951 = vld [vmem:[#allocation10 + $0x5c] sm:$0xf]
    %v1952 = vld [vmem:[#allocation10 + $0x60] sm:$0xf]
    %v1953 = vld [vmem:[#allocation10 + $0x64] sm:$0xf]
    %v1954 = vld [vmem:[#allocation10 + $0x68] sm:$0xf]
    %v1955 = vld [vmem:[#allocation10 + $0x6c] sm:$0xf]
    %v1956 = vld [vmem:[#allocation10 + $0x70] sm:$0xf]
    %v1957 = vld [vmem:[#allocation10 + $0x74] sm:$0xf]
    %v1958 = vld [vmem:[#allocation10 + $0x78] sm:$0xf]
    %v1959 = vld [vmem:[#allocation10 + $0x7c] sm:$0xf]
    %v1960 = vld [vmem:[%s6] sm:$0x1]
    %v1962 = vperm.slane %v1960, 0
    %v1996 = vunpack.c.l.b16 %v1928
    %v1997 = vunpack.c.l.b16 %v1929
    %v1998 = vunpack.c.l.b16 %v1930
    %v1999 = vunpack.c.l.b16 %v1931
    %v2000 = vunpack.c.l.b16 %v1932
    %v2001 = vunpack.c.l.b16 %v1933
    %v2002 = vunpack.c.l.b16 %v1934
    %v2003 = vunpack.c.l.b16 %v1935
    %v2004 = vunpack.c.l.b16 %v1936
    %v2005 = vunpack.c.l.b16 %v1937
    %v2006 = vunpack.c.l.b16 %v1938
    %v2007 = vunpack.c.l.b16 %v1939
    %v2008 = vunpack.c.l.b16 %v1940
    %v2009 = vunpack.c.l.b16 %v1941
    %v2010 = vunpack.c.l.b16 %v1942
    %v2011 = vunpack.c.l.b16 %v1943
    %v2012 = vunpack.c.l.b16 %v1944
    %v2013 = vunpack.c.l.b16 %v1945
    %v2014 = vunpack.c.l.b16 %v1946
    %v2015 = vunpack.c.l.b16 %v1947
    %v2016 = vunpack.c.l.b16 %v1948
    %v2017 = vunpack.c.l.b16 %v1949
    %v2018 = vunpack.c.l.b16 %v1950
    %v2019 = vunpack.c.l.b16 %v1951
    %v2020 = vunpack.c.l.b16 %v1952
    %v2021 = vunpack.c.l.b16 %v1953
    %v2022 = vunpack.c.l.b16 %v1954
    %v2023 = vunpack.c.l.b16 %v1955
    %v2024 = vunpack.c.l.b16 %v1956
    %v2025 = vunpack.c.l.b16 %v1957
    %v2026 = vunpack.c.l.b16 %v1958
    %v2027 = vunpack.c.l.b16 %v1959
    %v2028 = vpack.c.b16 %v1997, %v1996
    %v2029 = vpack.c.b16 %v1999, %v1998
    %v2030 = vpack.c.b16 %v2001, %v2000
    %v2031 = vpack.c.b16 %v2003, %v2002
    %v2032 = vpack.c.b16 %v2005, %v2004
    %v2033 = vpack.c.b16 %v2007, %v2006
    %v2034 = vpack.c.b16 %v2009, %v2008
    %v2035 = vpack.c.b16 %v2011, %v2010
    %v2036 = vpack.c.b16 %v2013, %v2012
    %v2037 = vpack.c.b16 %v2015, %v2014
    %v2038 = vpack.c.b16 %v2017, %v2016
    %v2039 = vpack.c.b16 %v2019, %v2018
    %v2040 = vpack.c.b16 %v2021, %v2020
    %v2041 = vpack.c.b16 %v2023, %v2022
    %v2042 = vpack.c.b16 %v2025, %v2024
    %v2043 = vpack.c.b16 %v2027, %v2026
    %2060 = vmatpush.bf16.msra.mxu0 %v2035
    %2061 = vmatpush.bf16.msra.mxu0 %v2034
    %2062 = vmatpush.bf16.msra.mxu0 %v2033
    %2063 = vmatpush.bf16.msra.mxu0 %v2032
    %2064 = vmatpush.bf16.msra.mxu0 %v2031
    %2065 = vmatpush.bf16.msra.mxu0 %v2030
    %2066 = vmatpush.bf16.msra.mxu0 %v2029
    %2067 = vmatpush.bf16.msra.mxu0 %v2028
    %2068 = vmatmul.bf16.gmra.mxu0 %v1926
    %v2069 = vpop.f32.mrf.mxu0
    %v2070 = vadd.f32 %v1962, %v2069
    %v2071 = vpop.f32.mrf.mxu0
    %2072 = vdwg.mxu0
    %2073 = vmatpush.bf16.msra.mxu0 %v2043
    %2074 = vmatpush.bf16.msra.mxu0 %v2042
    %2075 = vmatpush.bf16.msra.mxu0 %v2041
    %2076 = vmatpush.bf16.msra.mxu0 %v2040
    %2077 = vmatpush.bf16.msra.mxu0 %v2039
    %2078 = vmatpush.bf16.msra.mxu0 %v2038
    %2079 = vmatpush.bf16.msra.mxu0 %v2037
    %2080 = vmatpush.bf16.msra.mxu0 %v2036
    %2081 = vmatmul.bf16.gmra.mxu0 %v1927
    %v2082 = vpop.f32.mrf.mxu0
    %v2083 = vadd.f32 %v2070, %v2082
    %v2084 = vpop.f32.mrf.mxu0
    %2085 = vdwg.mxu0
    %v2086 = vlaneseq
    %v2087 = vand.u32 %v2086, 127
    %vm2088 = vcmp.lt.s32.totalorder %v2087, 10
    %v2089 = vsel %vm2088, %v2083, -1e+30
    %2090 = vmax.xlane.f32.xlu0 %v2089
    %v2091 = vpop.xlane.xlu0 %2090
    %v2092 = vsub.f32 %v2089, %v2091
    %v2093 = vmul.f32 %v2092, 1.442695
    %v2094 = vpow.pop %v2093
    %2095 = vadd.xlane.f32.xlu0 %v2094
    %v2096 = vpop.xlane.xlu0 %2095
    %v2097 = vrcp.pop %v2096
    %v2098 = vmul.f32 %v2094, %v2097
    %2099 = vst [vmem:[#allocation11] sm:$0xff] %v2098
    // Predicated region
    $region50: #{tpu_custom_call.1} parent=1 // pred_check
      _
    $region51: #{tpu_custom_call.1} parent=1 // pred_check_branch
      %2101 = sbr.rel (0) target = $region53
    $region52: #{tpu_custom_call.1} parent=1 // pred_region
      %2103 = vsyncadd [#allocation4], 0
      %s2105 = sshll.u32 [#allocation11], 4
      %s2106 = int_to_ptr.vmem [resolvable:$true] %s2105
      %s2107 = sshll.u32 %s7, 4
      %s2108 = int_to_ptr.hbm [resolvable:$true] %s2107
      %2110 = dma.vmem_to_hbm [thread:$0]  %s2106, 128, %s2108, [#allocation4]
    $region53: #{tpu_custom_call.1} parent=1 // pred_fallthru
      _
    // Predicated region
    $region54: #{tpu_custom_call.1} parent=1 // pred_check
      _
    $region55: #{tpu_custom_call.1} parent=1 // pred_check_branch
      %2112 = sbr.rel (0) target = $region57
    $region56: #{tpu_custom_call.1} parent=1 // pred_region
      %2114 = dma.done [#allocation4], 128
    $region57: #{tpu_custom_call.1} parent=1 // pred_fallthru
      _
    %2115 = vsyncpa [#allocation3], 1
    %2116 = vsyncpa [#allocation6], 1
    %2117 = vsyncpa [#allocation9], 1
    %2118 = vsyncpa [#allocation4], 1

</llo_original>
